<compile_context>
chip_gen: v7x
topology: tpu7x:2x2x1
jax: 0.10.0
libtpu: 0.0.40
codegen_flags: <defaults>
</compile_context>

<pallas_src>
import math

import jax
import jax.numpy as jnp
from jax.experimental import pallas as pl
from jax.experimental.pallas import tpu as pltpu

# ---- small synthetic LlamaConfig ----
SEQ = 8          # seq_length
HIDDEN = 32      # hidden_size
NUM_HEADS = 4    # num_attention_heads
HEAD_DIM = HIDDEN // NUM_HEADS
INTER = 64       # intermediate_size
EPS = 1e-6       # rms_norm_eps


def block_kernel(x_ref, rn1_ref, rn2_ref, wqkv_ref, wo_ref, wgu_ref, wd_ref,
                 cos_ref, sin_ref, o_ref):
    S, H = SEQ, HIDDEN
    bf16 = jnp.bfloat16
    x = x_ref[...]                                              # [S, H] f32

    # ---------- RMSNorm 1 (f32) ----------
    ms = jnp.mean(x * x, axis=-1, keepdims=True)
    xn = x * jax.lax.rsqrt(ms + EPS) * rn1_ref[...]             # rn1_ref: [1, H]

    # ---------- fused QKV(+rotary partners) projection: one lane-dense bf16 MXU pass ----------
    # columns: [ q*scale | k | v | rotate_half(q*scale) | rotate_half(k) ]   (rotate folded into W)
    qkv = jnp.dot(xn.astype(bf16), wqkv_ref[...],
                  preferred_element_type=jnp.float32)           # [S, 5H] f32

    # ---------- rotary for ALL heads at once (pure VPU FMA, no lane shuffles) ----------
    cos = cos_ref[...]                                          # [S, H] (per-head tiled)
    sin = sin_ref[...]
    q = qkv[:, 0 * H:1 * H] * cos + qkv[:, 3 * H:4 * H] * sin
    k = qkv[:, 1 * H:2 * H] * cos + qkv[:, 4 * H:5 * H] * sin
    v = qkv[:, 2 * H:3 * H]

    # ---------- head-batched attention (no per-head Python loop, no concatenates) ----------
    def to_heads(t):  # [S, H] -> [NUM_HEADS, S, HEAD_DIM] via 2-D transpose + tile-aligned reshape
        t3 = t.T.reshape(NUM_HEADS, HEAD_DIM, S)                # [NH, D, S]
        return jnp.swapaxes(t3, 1, 2)                           # [NH, S, D] (minor-dim swap)

    q3 = to_heads(q).astype(bf16)
    k3 = to_heads(k).astype(bf16)
    v3 = to_heads(v).astype(bf16)

    s = jnp.einsum('hqd,hkd->hqk', q3, k3,
                   preferred_element_type=jnp.float32)          # [NH, S, S] (scale already in Wq)
    row = jax.lax.broadcasted_iota(jnp.int32, (NUM_HEADS, S, S), 1)
    col = jax.lax.broadcasted_iota(jnp.int32, (NUM_HEADS, S, S), 2)
    s = jnp.where(col <= row, s, -1e30)                         # causal mask
    s = s - jnp.max(s, axis=-1, keepdims=True)
    p = jnp.exp(s)
    denom = jnp.sum(p, axis=-1, keepdims=True)
    p = p * pl.reciprocal(denom, approx=True)                   # EUP reciprocal instead of VALU divide

    a3 = jnp.einsum('hqk,hkd->hqd', p.astype(bf16), v3,
                    preferred_element_type=jnp.float32)         # [NH, S, D]
    attn = jnp.swapaxes(a3, 1, 2).reshape(H, S).T               # back to [S, H] (minor swap + free reshape + 2-D T)
    attn = jnp.dot(attn.astype(bf16), wo_ref[...],
                   preferred_element_type=jnp.float32)

    x1 = x + attn                                               # residual 1 (f32)

    # ---------- RMSNorm 2 + fused gate|up SiLU MLP ----------
    ms2 = jnp.mean(x1 * x1, axis=-1, keepdims=True)
    xn2 = x1 * jax.lax.rsqrt(ms2 + EPS) * rn2_ref[...]
    gu = jnp.dot(xn2.astype(bf16), wgu_ref[...],
                 preferred_element_type=jnp.float32)            # [S, 2*INTER] (128 lanes: dense)
    g = gu[:, :INTER]
    u = gu[:, INTER:]
    act = g * jax.lax.logistic(g)                               # SiLU in f32
    mlp = jnp.dot((act * u).astype(bf16), wd_ref[...],
                  preferred_element_type=jnp.float32)

    o_ref[...] = x1 + mlp                                       # residual 2


def _rotary_tables(seq, head_dim):
    pos = jnp.arange(seq, dtype=jnp.float32)
    inv_freq = 1.0 / (10000.0 ** (jnp.arange(0, head_dim, 2, dtype=jnp.float32) / head_dim))
    ang = pos[:, None] * inv_freq[None, :]                      # [S, D/2]
    cos = jnp.concatenate([jnp.cos(ang), jnp.cos(ang)], axis=-1)
    sin = jnp.concatenate([jnp.sin(ang), jnp.sin(ang)], axis=-1)
    return cos, sin                                             # [S, D]


def _rotate_half_matrix():
    # Signed block-diagonal permutation R such that (x @ R) == per-head rotate_half(x), x: [*, HIDDEN].
    half = HEAD_DIM // 2
    blk = jnp.zeros((HEAD_DIM, HEAD_DIM), jnp.float32)
    rows = jnp.concatenate([jnp.arange(half) + half, jnp.arange(half)])
    vals = jnp.concatenate([-jnp.ones(half), jnp.ones(half)])
    blk = blk.at[rows, jnp.arange(HEAD_DIM)].set(vals)
    return jnp.kron(jnp.eye(NUM_HEADS, dtype=jnp.float32), blk)  # [H, H]


def llama_block(x, params):
    # All layout/plumbing work happens here (trace time), not inside the kernel.
    cos, sin = _rotary_tables(x.shape[0], HEAD_DIM)
    cos_t = jnp.tile(cos, (1, NUM_HEADS))                        # [S, H] per-head tiled tables
    sin_t = jnp.tile(sin, (1, NUM_HEADS))

    R = _rotate_half_matrix()
    scale = 1.0 / math.sqrt(HEAD_DIM)
    wq_s = params["wq"] * scale                                  # fold 1/sqrt(D) into Wq
    # fused projection [H, 5H]: [ q | k | v | rotate_half partner of q | rotate_half partner of k ]
    wqkv = jnp.concatenate(
        [wq_s, params["wk"], params["wv"], wq_s @ R, params["wk"] @ R], axis=1)
    wgu = jnp.concatenate([params["wg"], params["wu"]], axis=1)  # fused [H, 2*INTER]

    bf16 = jnp.bfloat16
    inputs = (x, params["rn1"], params["rn2"],
              wqkv.astype(bf16), params["wo"].astype(bf16),
              wgu.astype(bf16), params["wd"].astype(bf16),
              cos_t, sin_t)
    in_specs = [pl.BlockSpec(memory_space=pltpu.MemorySpace.VMEM) for _ in inputs]
    return pl.pallas_call(
        block_kernel,
        out_shape=jax.ShapeDtypeStruct((x.shape[0], HIDDEN), jnp.float32),
        in_specs=in_specs,
        out_specs=pl.BlockSpec(memory_space=pltpu.MemorySpace.VMEM),
    )(*inputs)


# ---------------- pure-JAX f32 reference (PyTorch-module semantics, for verification) ----------------
def _rotate_half(x):
    d = x.shape[-1]
    return jnp.concatenate([-x[:, d // 2:], x[:, : d // 2]], axis=-1)


def reference_block(x, params):
    cos, sin = _rotary_tables(x.shape[0], HEAD_DIM)

    def rms(v, w):
        return v * jax.lax.rsqrt(jnp.mean(v * v, -1, keepdims=True) + EPS) * w

    xn = rms(x, params["rn1"])
    q, k, v = xn @ params["wq"], xn @ params["wk"], xn @ params["wv"]
    seq = x.shape[0]
    causal = jnp.tril(jnp.ones((seq, seq), bool))
    outs = []
    for h in range(NUM_HEADS):
        sl = slice(h * HEAD_DIM, (h + 1) * HEAD_DIM)
        qh = q[:, sl] * cos + _rotate_half(q[:, sl]) * sin
        kh = k[:, sl] * cos + _rotate_half(k[:, sl]) * sin
        s = (qh @ kh.T) / math.sqrt(HEAD_DIM)
        s = jnp.where(causal, s, -1e30)
        p = jax.nn.softmax(s, axis=-1)
        outs.append(p @ v[:, sl])
    x1 = x + jnp.concatenate(outs, -1) @ params["wo"]
    xn2 = rms(x1, params["rn2"])
    g, u = xn2 @ params["wg"], xn2 @ params["wu"]
    return x1 + (jax.nn.silu(g) * u) @ params["wd"]


if __name__ == "__main__":
    key = jax.random.PRNGKey(0)
    kx, kq, kk, kv, ko, kg, ku, kd, kr1, kr2 = jax.random.split(key, 10)

    # nn.Linear(in, out, bias=False).weight is [out, in]; we store the transposed [in, out].
    params = {
        "rn1": 1.0 + 0.01 * jax.random.normal(kr1, (1, HIDDEN), jnp.float32),
        "rn2": 1.0 + 0.01 * jax.random.normal(kr2, (1, HIDDEN), jnp.float32),
        "wq": 0.05 * jax.random.normal(kq, (HIDDEN, HIDDEN), jnp.float32),
        "wk": 0.05 * jax.random.normal(kk, (HIDDEN, HIDDEN), jnp.float32),
        "wv": 0.05 * jax.random.normal(kv, (HIDDEN, HIDDEN), jnp.float32),
        "wo": 0.05 * jax.random.normal(ko, (HIDDEN, HIDDEN), jnp.float32),
        "wg": 0.05 * jax.random.normal(kg, (HIDDEN, INTER), jnp.float32),
        "wu": 0.05 * jax.random.normal(ku, (HIDDEN, INTER), jnp.float32),
        "wd": 0.05 * jax.random.normal(kd, (INTER, HIDDEN), jnp.float32),
    }
    x = jax.random.normal(kx, (SEQ, HIDDEN), jnp.float32)

    out = jax.block_until_ready(llama_block(x, params))
    ref = jax.block_until_ready(reference_block(x, params))

    assert out.shape == (SEQ, HIDDEN) and out.dtype == jnp.float32
    # Tolerance relaxed vs the pure-f32 reference because the kernel uses bf16 MXU operands
    # (f32 accumulation) and pl.reciprocal(approx=True) for the softmax denominator, as recommended.
    assert jnp.allclose(out, ref, atol=2e-2, rtol=2e-2), "mismatch vs JAX reference"
    print("KERNEL_OK")
</pallas_src>

<mosaic_0001>
module attributes {stable_mosaic.version = 11 : i64} {
  func.func @block_kernel(%arg0: memref<8x32xf32, #tpu.memory_space<vmem>>, %arg1: memref<1x32xf32, #tpu.memory_space<vmem>>, %arg2: memref<1x32xf32, #tpu.memory_space<vmem>>, %arg3: memref<32x160xbf16, #tpu.memory_space<vmem>>, %arg4: memref<32x32xbf16, #tpu.memory_space<vmem>>, %arg5: memref<32x128xbf16, #tpu.memory_space<vmem>>, %arg6: memref<64x32xbf16, #tpu.memory_space<vmem>>, %arg7: memref<8x32xf32, #tpu.memory_space<vmem>>, %arg8: memref<8x32xf32, #tpu.memory_space<vmem>>, %arg9: memref<8x32xf32, #tpu.memory_space<vmem>>) attributes {dimension_semantics = [], scalar_prefetch = 0 : i64, scratch_operands = 0 : i64, tpu.core_type = #tpu.core_type<tc>} {
    %c0 = arith.constant 0 : index
    %c0_0 = arith.constant 0 : index
    %0 = vector.load %arg0[%c0, %c0_0] : memref<8x32xf32, #tpu.memory_space<vmem>>, vector<8x32xf32>
    %1 = arith.mulf %0, %0 : vector<8x32xf32>
    %cst = arith.constant dense<0.000000e+00> : vector<8xf32>
    %2 = vector.multi_reduction <add>, %1, %cst [1] : vector<8x32xf32> to vector<8xf32>
    %3 = vector.shape_cast %2 : vector<8xf32> to vector<8x1xf32>
    %cst_1 = arith.constant 3.200000e+01 : f32
    %4 = vector.broadcast %cst_1 : f32 to vector<8x1xf32>
    %5 = arith.divf %3, %4 : vector<8x1xf32>
    %cst_2 = arith.constant 9.99999997E-7 : f32
    %6 = vector.broadcast %cst_2 : f32 to vector<8x1xf32>
    %7 = arith.addf %5, %6 : vector<8x1xf32>
    %8 = math.rsqrt %7 : vector<8x1xf32>
    %9 = vector.broadcast %8 : vector<8x1xf32> to vector<8x32xf32>
    %10 = arith.mulf %0, %9 : vector<8x32xf32>
    %c0_3 = arith.constant 0 : index
    %c0_4 = arith.constant 0 : index
    %11 = vector.load %arg1[%c0_3, %c0_4] : memref<1x32xf32, #tpu.memory_space<vmem>>, vector<1x32xf32>
    %12 = vector.broadcast %11 : vector<1x32xf32> to vector<8x32xf32>
    %13 = arith.mulf %10, %12 : vector<8x32xf32>
    %14 = arith.truncf %13 : vector<8x32xf32> to vector<8x32xbf16>
    %c0_5 = arith.constant 0 : index
    %c0_6 = arith.constant 0 : index
    %15 = vector.load %arg3[%c0_5, %c0_6] : memref<32x160xbf16, #tpu.memory_space<vmem>>, vector<32x160xbf16>
    %cst_7 = arith.constant dense<0.000000e+00> : vector<8x160xf32>
    %16 = tpu.matmul %14, %15, %cst_7 {dimension_numbers = #tpu.dot_dimension_numbers<[1], [0], [0], [1], [0, 0, 1, 1], [], []>} : vector<8x32xbf16>, vector<32x160xbf16>, vector<8x160xf32> -> vector<8x160xf32>
    %c0_8 = arith.constant 0 : index
    %c0_9 = arith.constant 0 : index
    %17 = vector.load %arg7[%c0_8, %c0_9] : memref<8x32xf32, #tpu.memory_space<vmem>>, vector<8x32xf32>
    %c0_10 = arith.constant 0 : index
    %c0_11 = arith.constant 0 : index
    %18 = vector.load %arg8[%c0_10, %c0_11] : memref<8x32xf32, #tpu.memory_space<vmem>>, vector<8x32xf32>
    %19 = vector.extract_strided_slice %16 {offsets = [0, 0], sizes = [8, 32], strides = [1, 1]} : vector<8x160xf32> to vector<8x32xf32>
    %20 = arith.mulf %19, %17 : vector<8x32xf32>
    %21 = vector.extract_strided_slice %16 {offsets = [0, 96], sizes = [8, 32], strides = [1, 1]} : vector<8x160xf32> to vector<8x32xf32>
    %22 = arith.mulf %21, %18 : vector<8x32xf32>
    %23 = arith.addf %20, %22 : vector<8x32xf32>
    %24 = vector.extract_strided_slice %16 {offsets = [0, 32], sizes = [8, 32], strides = [1, 1]} : vector<8x160xf32> to vector<8x32xf32>
    %25 = arith.mulf %24, %17 : vector<8x32xf32>
    %26 = vector.extract_strided_slice %16 {offsets = [0, 128], sizes = [8, 32], strides = [1, 1]} : vector<8x160xf32> to vector<8x32xf32>
    %27 = arith.mulf %26, %18 : vector<8x32xf32>
    %28 = arith.addf %25, %27 : vector<8x32xf32>
    %29 = vector.extract_strided_slice %16 {offsets = [0, 64], sizes = [8, 32], strides = [1, 1]} : vector<8x160xf32> to vector<8x32xf32>
    %30 = tpu.transpose %23, [1, 0] : vector<8x32xf32> -> vector<32x8xf32>
    %31 = vector.shape_cast %30 : vector<32x8xf32> to vector<4x8x8xf32>
    %32 = tpu.transpose %31, [0, 2, 1] : vector<4x8x8xf32> -> vector<4x8x8xf32>
    %33 = arith.truncf %32 : vector<4x8x8xf32> to vector<4x8x8xbf16>
    %34 = tpu.transpose %28, [1, 0] : vector<8x32xf32> -> vector<32x8xf32>
    %35 = vector.shape_cast %34 : vector<32x8xf32> to vector<4x8x8xf32>
    %36 = tpu.transpose %35, [0, 2, 1] : vector<4x8x8xf32> -> vector<4x8x8xf32>
    %37 = arith.truncf %36 : vector<4x8x8xf32> to vector<4x8x8xbf16>
    %38 = tpu.transpose %29, [1, 0] : vector<8x32xf32> -> vector<32x8xf32>
    %39 = vector.shape_cast %38 : vector<32x8xf32> to vector<4x8x8xf32>
    %40 = tpu.transpose %39, [0, 2, 1] : vector<4x8x8xf32> -> vector<4x8x8xf32>
    %41 = arith.truncf %40 : vector<4x8x8xf32> to vector<4x8x8xbf16>
    "tpu.trace_start"() <{level = 10 : i32, message = "hqd,hkd->hqk"}> : () -> ()
    %cst_12 = arith.constant dense<0.000000e+00> : vector<4x8x8xf32>
    %42 = tpu.matmul %33, %37, %cst_12 {dimension_numbers = #tpu.dot_dimension_numbers<[2], [2], [1], [1], [0, 0, 0, 1, 1, 1], [0], [0]>} : vector<4x8x8xbf16>, vector<4x8x8xbf16>, vector<4x8x8xf32> -> vector<4x8x8xf32>
    "tpu.trace_stop"() : () -> ()
    %43 = tpu.iota {dimensions = array<i32: 1>} : vector<4x8x8xi32>
    %44 = tpu.iota {dimensions = array<i32: 2>} : vector<4x8x8xi32>
    %45 = arith.cmpi sle, %44, %43 : vector<4x8x8xi32>
    %cst_13 = arith.constant -1.000000e+30 : f32
    %46 = vector.broadcast %cst_13 : f32 to vector<4x8x8xf32>
    %47 = arith.select %45, %42, %46 : vector<4x8x8xi1>, vector<4x8x8xf32>
    %cst_14 = arith.constant dense<0xFF800000> : vector<4x8xf32>
    %48 = vector.multi_reduction <maximumf>, %47, %cst_14 [2] : vector<4x8x8xf32> to vector<4x8xf32>
    %49 = vector.shape_cast %48 : vector<4x8xf32> to vector<4x8x1xf32>
    %50 = vector.broadcast %49 : vector<4x8x1xf32> to vector<4x8x8xf32>
    %51 = arith.subf %47, %50 : vector<4x8x8xf32>
    %52 = math.exp %51 : vector<4x8x8xf32>
    %cst_15 = arith.constant dense<0.000000e+00> : vector<4x8xf32>
    %53 = vector.multi_reduction <add>, %52, %cst_15 [2] : vector<4x8x8xf32> to vector<4x8xf32>
    %54 = vector.shape_cast %53 : vector<4x8xf32> to vector<4x8x1xf32>
    %55 = tpu.reciprocal %54 {approx = true} : vector<4x8x1xf32> -> vector<4x8x1xf32>
    %56 = vector.broadcast %55 : vector<4x8x1xf32> to vector<4x8x8xf32>
    %57 = arith.mulf %52, %56 : vector<4x8x8xf32>
    %58 = arith.truncf %57 : vector<4x8x8xf32> to vector<4x8x8xbf16>
    "tpu.trace_start"() <{level = 10 : i32, message = "hqk,hkd->hqd"}> : () -> ()
    %cst_16 = arith.constant dense<0.000000e+00> : vector<4x8x8xf32>
    %59 = tpu.matmul %58, %41, %cst_16 {dimension_numbers = #tpu.dot_dimension_numbers<[2], [1], [1], [2], [0, 0, 0, 1, 1, 2], [0], [0]>} : vector<4x8x8xbf16>, vector<4x8x8xbf16>, vector<4x8x8xf32> -> vector<4x8x8xf32>
    "tpu.trace_stop"() : () -> ()
    %60 = tpu.transpose %59, [0, 2, 1] : vector<4x8x8xf32> -> vector<4x8x8xf32>
    %61 = vector.shape_cast %60 : vector<4x8x8xf32> to vector<32x8xf32>
    %62 = tpu.transpose %61, [1, 0] : vector<32x8xf32> -> vector<8x32xf32>
    %63 = arith.truncf %62 : vector<8x32xf32> to vector<8x32xbf16>
    %c0_17 = arith.constant 0 : index
    %c0_18 = arith.constant 0 : index
    %64 = vector.load %arg4[%c0_17, %c0_18] : memref<32x32xbf16, #tpu.memory_space<vmem>>, vector<32x32xbf16>
    %cst_19 = arith.constant dense<0.000000e+00> : vector<8x32xf32>
    %65 = tpu.matmul %63, %64, %cst_19 {dimension_numbers = #tpu.dot_dimension_numbers<[1], [0], [0], [1], [0, 0, 1, 1], [], []>} : vector<8x32xbf16>, vector<32x32xbf16>, vector<8x32xf32> -> vector<8x32xf32>
    %66 = arith.addf %0, %65 : vector<8x32xf32>
    %67 = arith.mulf %66, %66 : vector<8x32xf32>
    %cst_20 = arith.constant dense<0.000000e+00> : vector<8xf32>
    %68 = vector.multi_reduction <add>, %67, %cst_20 [1] : vector<8x32xf32> to vector<8xf32>
    %69 = vector.shape_cast %68 : vector<8xf32> to vector<8x1xf32>
    %cst_21 = arith.constant 3.200000e+01 : f32
    %70 = vector.broadcast %cst_21 : f32 to vector<8x1xf32>
    %71 = arith.divf %69, %70 : vector<8x1xf32>
    %cst_22 = arith.constant 9.99999997E-7 : f32
    %72 = vector.broadcast %cst_22 : f32 to vector<8x1xf32>
    %73 = arith.addf %71, %72 : vector<8x1xf32>
    %74 = math.rsqrt %73 : vector<8x1xf32>
    %75 = vector.broadcast %74 : vector<8x1xf32> to vector<8x32xf32>
    %76 = arith.mulf %66, %75 : vector<8x32xf32>
    %c0_23 = arith.constant 0 : index
    %c0_24 = arith.constant 0 : index
    %77 = vector.load %arg2[%c0_23, %c0_24] : memref<1x32xf32, #tpu.memory_space<vmem>>, vector<1x32xf32>
    %78 = vector.broadcast %77 : vector<1x32xf32> to vector<8x32xf32>
    %79 = arith.mulf %76, %78 : vector<8x32xf32>
    %80 = arith.truncf %79 : vector<8x32xf32> to vector<8x32xbf16>
    %c0_25 = arith.constant 0 : index
    %c0_26 = arith.constant 0 : index
    %81 = vector.load %arg5[%c0_25, %c0_26] : memref<32x128xbf16, #tpu.memory_space<vmem>>, vector<32x128xbf16>
    %cst_27 = arith.constant dense<0.000000e+00> : vector<8x128xf32>
    %82 = tpu.matmul %80, %81, %cst_27 {dimension_numbers = #tpu.dot_dimension_numbers<[1], [0], [0], [1], [0, 0, 1, 1], [], []>} : vector<8x32xbf16>, vector<32x128xbf16>, vector<8x128xf32> -> vector<8x128xf32>
    %83 = vector.extract_strided_slice %82 {offsets = [0, 0], sizes = [8, 64], strides = [1, 1]} : vector<8x128xf32> to vector<8x64xf32>
    %84 = vector.extract_strided_slice %82 {offsets = [0, 64], sizes = [8, 64], strides = [1, 1]} : vector<8x128xf32> to vector<8x64xf32>
    %85 = arith.negf %83 : vector<8x64xf32>
    %86 = math.exp %85 : vector<8x64xf32>
    %cst_28 = arith.constant 1.000000e+00 : f32
    %87 = vector.broadcast %cst_28 : f32 to vector<8x64xf32>
    %88 = arith.addf %87, %86 : vector<8x64xf32>
    %89 = arith.divf %87, %88 : vector<8x64xf32>
    %90 = arith.mulf %83, %89 : vector<8x64xf32>
    %91 = arith.mulf %90, %84 : vector<8x64xf32>
    %92 = arith.truncf %91 : vector<8x64xf32> to vector<8x64xbf16>
    %c0_29 = arith.constant 0 : index
    %c0_30 = arith.constant 0 : index
    %93 = vector.load %arg6[%c0_29, %c0_30] : memref<64x32xbf16, #tpu.memory_space<vmem>>, vector<64x32xbf16>
    %cst_31 = arith.constant dense<0.000000e+00> : vector<8x32xf32>
    %94 = tpu.matmul %92, %93, %cst_31 {dimension_numbers = #tpu.dot_dimension_numbers<[1], [0], [0], [1], [0, 0, 1, 1], [], []>} : vector<8x64xbf16>, vector<64x32xbf16>, vector<8x32xf32> -> vector<8x32xf32>
    %95 = arith.addf %66, %94 : vector<8x32xf32>
    %c0_32 = arith.constant 0 : index
    %c0_33 = arith.constant 0 : index
    %96 = vector.load %arg9[%c0_32, %c0_33] : memref<8x32xf32, #tpu.memory_space<vmem>>, vector<8x32xf32>
    tpu.vector_store %arg9[%c0_32, %c0_33], %95 {strides = array<i32>} : memref<8x32xf32, #tpu.memory_space<vmem>>, vector<8x32xf32>,
    return
  }
}

</mosaic_0001>

<llo_original>
// kernel: tpu_custom_call.1
$region0: #{tpu_custom_call.1}
  #allocation0 [shape = 'u32[]', space=smem, size = 0x4, offset = 0x4, fixed_abs, tag = 'smem constant byte address 0x4 - core index']
  #allocation1 [shape = 'u32[144,128]{1,0:T(1,128)}', space=vmem, size = 0x12000, scoped, tag = 'internal scratch']
  %s0 = inlined_call_operand.hbm [shape: f32[8,32], index: 0, kind: input, shape index: {}]
  %s1 = inlined_call_operand.vmem [shape: f32[1,32], index: 1, kind: input, shape index: {}]
  %s2 = inlined_call_operand.vmem [shape: f32[1,32], index: 2, kind: input, shape index: {}]
  %s3 = inlined_call_operand.vmem [shape: bf16[32,160], index: 3, kind: input, shape index: {}]
  %s4 = inlined_call_operand.vmem [shape: bf16[32,32], index: 4, kind: input, shape index: {}]
  %s5 = inlined_call_operand.hbm [shape: bf16[32,128], index: 5, kind: input, shape index: {}]
  %s6 = inlined_call_operand.vmem [shape: bf16[64,32], index: 6, kind: input, shape index: {}]
  %s7 = inlined_call_operand.vmem [shape: f32[8,32], index: 7, kind: input, shape index: {}]
  %s8 = inlined_call_operand.hbm [shape: f32[8,32], index: 8, kind: input, shape index: {}]
  %s9 = inlined_call_operand.hbm [shape: f32[8,32], index: 9, kind: output, shape index: {}]
  %s10 = sld [smem:[#allocation0]]
  $region58: #{tpu_custom_call.1} parent=0
    _
  %s12 = ssub.s32 1, %s10
  %s13 = scalar_select 0, %s12, %s10
  $region1: #{tpu_custom_call.1} parent=0
    #allocation2 [shape = 'u8[4096]{0}', space=vmem, size = 0x1000, scoped, tag = 'input window, operand 0, single buffered']
    #allocation3 [shape = 's32[1]{0}', space=sflag, size = 0x4, scoped, tag = 'scoped memory for tpu_custom_call.1']
    #allocation4 [shape = 's32[1]{0}', space=sflag, size = 0x4, scoped, tag = 'scoped memory for tpu_custom_call.1']
    #allocation5 [shape = 'u8[8192]{0}', space=vmem, size = 0x2000, scoped, tag = 'input window, operand 5, single buffered']
    #allocation6 [shape = 's32[1]{0}', space=sflag, size = 0x4, scoped, tag = 'scoped memory for tpu_custom_call.1']
    #allocation7 [shape = 'u8[4096]{0}', space=vmem, size = 0x1000, scoped, tag = 'input window, operand 8, single buffered']
    #allocation8 [shape = 'u8[4096]{0}', space=vmem, size = 0x1000, scoped, tag = 'output window, operand 0, single buffered']
    %14 = vsyncpa [#allocation3], 0
    %15 = vsyncpa [#allocation6], 0
    %16 = vsyncpa [#allocation4], 0
    // Predicated region
    $region2: #{tpu_custom_call.1} parent=1 // pred_check
      _
    $region3: #{tpu_custom_call.1} parent=1 // pred_check_branch
      %18 = sbr.rel (0) target = $region5
    $region4: #{tpu_custom_call.1} parent=1 // pred_region
      %s20 = ssub.s32 128, 128
      %21 = vsyncadd [#allocation3], %s20
      %s23 = sshll.u32 [#allocation2], 4
      %s24 = int_to_ptr.vmem [resolvable:$true] %s23
      %26 = dma.hbm_to_vmem [thread:$0]  %s0, 128, %s24, [#allocation3]
    $region5: #{tpu_custom_call.1} parent=1 // pred_fallthru
      _
    // Predicated region
    $region6: #{tpu_custom_call.1} parent=1 // pred_check
      _
    $region7: #{tpu_custom_call.1} parent=1 // pred_check_branch
      %28 = sbr.rel (0) target = $region9
    $region8: #{tpu_custom_call.1} parent=1 // pred_region
      _
    $region9: #{tpu_custom_call.1} parent=1 // pred_fallthru
      _
    // Predicated region
    $region10: #{tpu_custom_call.1} parent=1 // pred_check
      _
    $region11: #{tpu_custom_call.1} parent=1 // pred_check_branch
      %30 = sbr.rel (0) target = $region13
    $region12: #{tpu_custom_call.1} parent=1 // pred_region
      _
    $region13: #{tpu_custom_call.1} parent=1 // pred_fallthru
      _
    // Predicated region
    $region14: #{tpu_custom_call.1} parent=1 // pred_check
      _
    $region15: #{tpu_custom_call.1} parent=1 // pred_check_branch
      %32 = sbr.rel (0) target = $region17
    $region16: #{tpu_custom_call.1} parent=1 // pred_region
      _
    $region17: #{tpu_custom_call.1} parent=1 // pred_fallthru
      _
    // Predicated region
    $region18: #{tpu_custom_call.1} parent=1 // pred_check
      _
    $region19: #{tpu_custom_call.1} parent=1 // pred_check_branch
      %34 = sbr.rel (0) target = $region21
    $region20: #{tpu_custom_call.1} parent=1 // pred_region
      _
    $region21: #{tpu_custom_call.1} parent=1 // pred_fallthru
      _
    // Predicated region
    $region22: #{tpu_custom_call.1} parent=1 // pred_check
      _
    $region23: #{tpu_custom_call.1} parent=1 // pred_check_branch
      %36 = sbr.rel (0) target = $region25
    $region24: #{tpu_custom_call.1} parent=1 // pred_region
      %s38 = ssub.s32 256, 256
      %39 = vsyncadd [#allocation6], %s38
      %s40 = sshll.u32 [#allocation5], 4
      %s41 = int_to_ptr.vmem [resolvable:$true] %s40
      %46 = dma.hbm_to_vmem [thread:$0]  %s5, 256, %s41, [#allocation6], 64, 64, 4
    $region25: #{tpu_custom_call.1} parent=1 // pred_fallthru
      _
    // Predicated region
    $region26: #{tpu_custom_call.1} parent=1 // pred_check
      _
    $region27: #{tpu_custom_call.1} parent=1 // pred_check_branch
      %48 = sbr.rel (0) target = $region29
    $region28: #{tpu_custom_call.1} parent=1 // pred_region
      _
    $region29: #{tpu_custom_call.1} parent=1 // pred_fallthru
      _
    // Predicated region
    $region30: #{tpu_custom_call.1} parent=1 // pred_check
      _
    $region31: #{tpu_custom_call.1} parent=1 // pred_check_branch
      %50 = sbr.rel (0) target = $region33
    $region32: #{tpu_custom_call.1} parent=1 // pred_region
      _
    $region33: #{tpu_custom_call.1} parent=1 // pred_fallthru
      _
    // Predicated region
    $region34: #{tpu_custom_call.1} parent=1 // pred_check
      _
    $region35: #{tpu_custom_call.1} parent=1 // pred_check_branch
      %52 = sbr.rel (0) target = $region37
    $region36: #{tpu_custom_call.1} parent=1 // pred_region
      %s54 = ssub.s32 128, 128
      %55 = vsyncadd [#allocation6], %s54
      %s57 = sshll.u32 [#allocation7], 4
      %s58 = int_to_ptr.vmem [resolvable:$true] %s57
      %60 = dma.hbm_to_vmem [thread:$0]  %s8, 128, %s58, [#allocation6]
    $region37: #{tpu_custom_call.1} parent=1 // pred_fallthru
      _
    // Predicated region
    $region38: #{tpu_custom_call.1} parent=1 // pred_check
      _
    $region39: #{tpu_custom_call.1} parent=1 // pred_check_branch
      %62 = sbr.rel (0) target = $region41
    $region40: #{tpu_custom_call.1} parent=1 // pred_region
      %63 = dma.done [#allocation3], 128
    $region41: #{tpu_custom_call.1} parent=1 // pred_fallthru
      _
    // Predicated region
    $region42: #{tpu_custom_call.1} parent=1 // pred_check
      _
    $region43: #{tpu_custom_call.1} parent=1 // pred_check_branch
      %65 = sbr.rel (0) target = $region45
    $region44: #{tpu_custom_call.1} parent=1 // pred_region
      %66 = dma.done [#allocation6], 256
    $region45: #{tpu_custom_call.1} parent=1 // pred_fallthru
      _
    // Predicated region
    $region46: #{tpu_custom_call.1} parent=1 // pred_check
      _
    $region47: #{tpu_custom_call.1} parent=1 // pred_check_branch
      %68 = sbr.rel (0) target = $region49
    $region48: #{tpu_custom_call.1} parent=1 // pred_region
      %69 = dma.done [#allocation6], 128
    $region49: #{tpu_custom_call.1} parent=1 // pred_fallthru
      _
    %v71 = vld [vmem:[#allocation2] sm:$0xff]
    %v72 = vmul.f32 %v71, %v71
    %vm73 = vcmask 261120
    %v74 = vsel %vm73, %v72, 0.0
    %75 = vadd.xlane.f32.xlu0 %v74
    %v76 = vpop.xlane.xlu0 %75
    %v77 = vrcp.pop 32.0
    %v78 = vmul.f32 %v76, %v77
    %v79 = vadd.f32 %v78, 1e-06
    %v80 = vrsqrt.pop %v79
    %v81 = vmul.f32 %v71, %v80
    %v82 = vld [vmem:[%s1] sm:$0x1]
    %v84 = vlaneseq
    %v85 = vshrl.u32 %v84, 7
    %v86 = vsub.s32 0, %v85
    %v87 = vrot.slane %v82, %v86
    %v89 = vmul.f32 %v81, %v87
    %v90 = vpack.c.bf16 %v89, %v89
    %v91 = vld [vmem:[%s3] sm:$0xff]
    %v92 = vld [vmem:[%s3 + $0x8] sm:$0xff]
    %v93 = vld [vmem:[%s3 + $0x10] sm:$0xff]
    %v94 = vld [vmem:[%s3 + $0x18] sm:$0xff]
    %v99 = vunpack.c.l.b16 %v91
    %v100 = vunpack.c.h.b16 %v91
    %v101 = vunpack.c.l.b16 %v92
    %v102 = vunpack.c.h.b16 %v92
    %v103 = vunpack.c.l.b16 %v93
    %v104 = vunpack.c.h.b16 %v93
    %v105 = vunpack.c.l.b16 %v94
    %v106 = vunpack.c.h.b16 %v94
    %v107 = vpack.c.b16 %v101, %v99
    %v108 = vpack.c.b16 %v102, %v100
    %v109 = vpack.c.b16 %v105, %v103
    %v110 = vpack.c.b16 %v106, %v104
    %v116 = vsel %vm73, %v90, 0
    %118 = vmatprep.subr.bf16.mxu0 %v108
    %119 = vmatpush1.bf16.msra.mxu0 %v107
    %120 = vmatprep.subr.bf16.mxu0 %v110
    %121 = vmatpush1.bf16.msra.mxu0 %v109
    %122 = vmatprep.subr.bf16.mxu0 0
    %123 = vmatpush1.bf16.msra.mxu0 0
    %124 = vmatprep.subr.bf16.mxu0 0
    %125 = vmatpush1.bf16.msra.mxu0 0
    %126 = vmatprep.subr.bf16.mxu0 0
    %127 = vmatpush1.bf16.msra.mxu0 0
    %128 = vmatprep.subr.bf16.mxu0 0
    %129 = vmatpush1.bf16.msra.mxu0 0
    %130 = vmatprep.subr.bf16.mxu0 0
    %131 = vmatpush1.bf16.msra.mxu0 0
    %132 = vmatprep.subr.bf16.mxu0 0
    %133 = vmatpush1.bf16.msra.mxu0 0
    %134 = vmatprep.subr.bf16.mxu0 0
    %135 = vmatpush1.bf16.msra.mxu0 0
    %136 = vmatprep.subr.bf16.mxu0 0
    %137 = vmatpush1.bf16.msra.mxu0 0
    %138 = vmatprep.subr.bf16.mxu0 0
    %139 = vmatpush1.bf16.msra.mxu0 0
    %140 = vmatprep.subr.bf16.mxu0 0
    %141 = vmatpush1.bf16.msra.mxu0 0
    %142 = vmatprep.subr.bf16.mxu0 0
    %143 = vmatpush1.bf16.msra.mxu0 0
    %144 = vmatprep.subr.bf16.mxu0 0
    %145 = vmatpush1.bf16.msra.mxu0 0
    %146 = vmatprep.subr.bf16.mxu0 0
    %147 = vmatpush1.bf16.msra.mxu0 0
    %148 = vmatprep.subr.bf16.mxu0 0
    %149 = vmatpush1.bf16.msra.mxu0 0
    %150 = vmatprep.mubr.bf16.mxu0 0
    %151 = vmatmul.mubr.bf16.gmra.mrb[0].mxu0 %v116
    %v152 = vpop.f32.mrb[0].mxu0
    %v153 = vadd.f32 0.0, %v152
    %v154 = vpop.f32.mrb[0].mxu0
    %v155 = vadd.f32 0.0, %v154
    %v156 = vpop.f32.mrb[0].mxu0
    %v157 = vpop.f32.mrb[0].mxu0
    %158 = vdwg.mxu0
    %v159 = vld [vmem:[%s7] sm:$0xff]
    %v160 = vld [vmem:[#allocation7] sm:$0xff]
    %v161 = vmul.f32 %v153, %v159
    %163 = vrot.lane.b32.xlu0 %v160, 96
    %v164 = vpop.permute.xlu0 %163
    %v166 = vmul.f32 %v153, %v164
    %168 = vrot.lane.b32.xlu0 %v166, 32
    %v169 = vpop.permute.xlu0 %168
    %v171 = vadd.f32 %v161, %v169
    %173 = vrot.lane.b32.xlu0 %v159, 32
    %v174 = vpop.permute.xlu0 %173
    %v176 = vmul.f32 %v153, %v174
    %v177 = vmul.f32 %v155, %v160
    %179 = vrot.lane.b32.xlu0 %v177, 32
    %v180 = vpop.permute.xlu0 %179
    %v182 = vadd.f32 %v176, %v180
    %183 = vxpose.xlu0.b32.start [1/16] %v171, 128
    %184 = vxpose.xlu0.b32.cont [2/16] 0.0, 128
    %185 = vxpose.xlu0.b32.cont [3/16] 0.0, 128
    %186 = vxpose.xlu0.b32.cont [4/16] 0.0, 128
    %187 = vxpose.xlu0.b32.cont [5/16] 0.0, 128
    %188 = vxpose.xlu0.b32.cont [6/16] 0.0, 128
    %189 = vxpose.xlu0.b32.cont [7/16] 0.0, 128
    %190 = vxpose.xlu0.b32.cont [8/16] 0.0, 128
    %191 = vxpose.xlu0.b32.cont [9/16] 0.0, 128
    %192 = vxpose.xlu0.b32.cont [10/16] 0.0, 128
    %193 = vxpose.xlu0.b32.cont [11/16] 0.0, 128
    %194 = vxpose.xlu0.b32.cont [12/16] 0.0, 128
    %195 = vxpose.xlu0.b32.cont [13/16] 0.0, 128
    %196 = vxpose.xlu0.b32.cont [14/16] 0.0, 128
    %197 = vxpose.xlu0.b32.cont [15/16] 0.0, 128
    %198 = vxpose.xlu0.b32.end [16/16] 0.0, 128
    %v199 = vpop.trf.xlu0
    %v200 = vpop.trf.xlu0
    %v201 = vpop.trf.xlu0
    %v202 = vpop.trf.xlu0
    %v203 = vpop.trf.xlu0
    %v204 = vpop.trf.xlu0
    %v205 = vpop.trf.xlu0
    %v206 = vpop.trf.xlu0
    %v207 = vpop.trf.xlu0
    %v208 = vpop.trf.xlu0
    %v209 = vpop.trf.xlu0
    %v210 = vpop.trf.xlu0
    %v211 = vpop.trf.xlu0
    %v212 = vpop.trf.xlu0
    %v213 = vpop.trf.xlu0
    %v214 = vpop.trf.xlu0
    %215 = vxpose.xlu0.b32.start [1/16] %v199, 128
    %216 = vxpose.xlu0.b32.cont [2/16] 0.0, 128
    %217 = vxpose.xlu0.b32.cont [3/16] 0.0, 128
    %218 = vxpose.xlu0.b32.cont [4/16] 0.0, 128
    %219 = vxpose.xlu0.b32.cont [5/16] 0.0, 128
    %220 = vxpose.xlu0.b32.cont [6/16] 0.0, 128
    %221 = vxpose.xlu0.b32.cont [7/16] 0.0, 128
    %222 = vxpose.xlu0.b32.cont [8/16] 0.0, 128
    %223 = vxpose.xlu0.b32.cont [9/16] 0.0, 128
    %224 = vxpose.xlu0.b32.cont [10/16] 0.0, 128
    %225 = vxpose.xlu0.b32.cont [11/16] 0.0, 128
    %226 = vxpose.xlu0.b32.cont [12/16] 0.0, 128
    %227 = vxpose.xlu0.b32.cont [13/16] 0.0, 128
    %228 = vxpose.xlu0.b32.cont [14/16] 0.0, 128
    %229 = vxpose.xlu0.b32.cont [15/16] 0.0, 128
    %230 = vxpose.xlu0.b32.end [16/16] 0.0, 128
    %v231 = vpop.trf.xlu0
    %v232 = vpop.trf.xlu0
    %v233 = vpop.trf.xlu0
    %v234 = vpop.trf.xlu0
    %v235 = vpop.trf.xlu0
    %v236 = vpop.trf.xlu0
    %v237 = vpop.trf.xlu0
    %v238 = vpop.trf.xlu0
    %v239 = vpop.trf.xlu0
    %v240 = vpop.trf.xlu0
    %v241 = vpop.trf.xlu0
    %v242 = vpop.trf.xlu0
    %v243 = vpop.trf.xlu0
    %v244 = vpop.trf.xlu0
    %v245 = vpop.trf.xlu0
    %v246 = vpop.trf.xlu0
    %247 = vxpose.xlu0.b32.start [1/16] %v200, 128
    %248 = vxpose.xlu0.b32.cont [2/16] 0.0, 128
    %249 = vxpose.xlu0.b32.cont [3/16] 0.0, 128
    %250 = vxpose.xlu0.b32.cont [4/16] 0.0, 128
    %251 = vxpose.xlu0.b32.cont [5/16] 0.0, 128
    %252 = vxpose.xlu0.b32.cont [6/16] 0.0, 128
    %253 = vxpose.xlu0.b32.cont [7/16] 0.0, 128
    %254 = vxpose.xlu0.b32.cont [8/16] 0.0, 128
    %255 = vxpose.xlu0.b32.cont [9/16] 0.0, 128
    %256 = vxpose.xlu0.b32.cont [10/16] 0.0, 128
    %257 = vxpose.xlu0.b32.cont [11/16] 0.0, 128
    %258 = vxpose.xlu0.b32.cont [12/16] 0.0, 128
    %259 = vxpose.xlu0.b32.cont [13/16] 0.0, 128
    %260 = vxpose.xlu0.b32.cont [14/16] 0.0, 128
    %261 = vxpose.xlu0.b32.cont [15/16] 0.0, 128
    %262 = vxpose.xlu0.b32.end [16/16] 0.0, 128
    %v263 = vpop.trf.xlu0
    %v264 = vpop.trf.xlu0
    %v265 = vpop.trf.xlu0
    %v266 = vpop.trf.xlu0
    %v267 = vpop.trf.xlu0
    %v268 = vpop.trf.xlu0
    %v269 = vpop.trf.xlu0
    %v270 = vpop.trf.xlu0
    %v271 = vpop.trf.xlu0
    %v272 = vpop.trf.xlu0
    %v273 = vpop.trf.xlu0
    %v274 = vpop.trf.xlu0
    %v275 = vpop.trf.xlu0
    %v276 = vpop.trf.xlu0
    %v277 = vpop.trf.xlu0
    %v278 = vpop.trf.xlu0
    %279 = vxpose.xlu0.b32.start [1/16] %v201, 128
    %280 = vxpose.xlu0.b32.cont [2/16] 0.0, 128
    %281 = vxpose.xlu0.b32.cont [3/16] 0.0, 128
    %282 = vxpose.xlu0.b32.cont [4/16] 0.0, 128
    %283 = vxpose.xlu0.b32.cont [5/16] 0.0, 128
    %284 = vxpose.xlu0.b32.cont [6/16] 0.0, 128
    %285 = vxpose.xlu0.b32.cont [7/16] 0.0, 128
    %286 = vxpose.xlu0.b32.cont [8/16] 0.0, 128
    %287 = vxpose.xlu0.b32.cont [9/16] 0.0, 128
    %288 = vxpose.xlu0.b32.cont [10/16] 0.0, 128
    %289 = vxpose.xlu0.b32.cont [11/16] 0.0, 128
    %290 = vxpose.xlu0.b32.cont [12/16] 0.0, 128
    %291 = vxpose.xlu0.b32.cont [13/16] 0.0, 128
    %292 = vxpose.xlu0.b32.cont [14/16] 0.0, 128
    %293 = vxpose.xlu0.b32.cont [15/16] 0.0, 128
    %294 = vxpose.xlu0.b32.end [16/16] 0.0, 128
    %v295 = vpop.trf.xlu0
    %v296 = vpop.trf.xlu0
    %v297 = vpop.trf.xlu0
    %v298 = vpop.trf.xlu0
    %v299 = vpop.trf.xlu0
    %v300 = vpop.trf.xlu0
    %v301 = vpop.trf.xlu0
    %v302 = vpop.trf.xlu0
    %v303 = vpop.trf.xlu0
    %v304 = vpop.trf.xlu0
    %v305 = vpop.trf.xlu0
    %v306 = vpop.trf.xlu0
    %v307 = vpop.trf.xlu0
    %v308 = vpop.trf.xlu0
    %v309 = vpop.trf.xlu0
    %v310 = vpop.trf.xlu0
    %311 = vxpose.xlu0.b32.start [1/16] %v202, 128
    %312 = vxpose.xlu0.b32.cont [2/16] 0.0, 128
    %313 = vxpose.xlu0.b32.cont [3/16] 0.0, 128
    %314 = vxpose.xlu0.b32.cont [4/16] 0.0, 128
    %315 = vxpose.xlu0.b32.cont [5/16] 0.0, 128
    %316 = vxpose.xlu0.b32.cont [6/16] 0.0, 128
    %317 = vxpose.xlu0.b32.cont [7/16] 0.0, 128
    %318 = vxpose.xlu0.b32.cont [8/16] 0.0, 128
    %319 = vxpose.xlu0.b32.cont [9/16] 0.0, 128
    %320 = vxpose.xlu0.b32.cont [10/16] 0.0, 128
    %321 = vxpose.xlu0.b32.cont [11/16] 0.0, 128
    %322 = vxpose.xlu0.b32.cont [12/16] 0.0, 128
    %323 = vxpose.xlu0.b32.cont [13/16] 0.0, 128
    %324 = vxpose.xlu0.b32.cont [14/16] 0.0, 128
    %325 = vxpose.xlu0.b32.cont [15/16] 0.0, 128
    %326 = vxpose.xlu0.b32.end [16/16] 0.0, 128
    %v327 = vpop.trf.xlu0
    %v328 = vpop.trf.xlu0
    %v329 = vpop.trf.xlu0
    %v330 = vpop.trf.xlu0
    %v331 = vpop.trf.xlu0
    %v332 = vpop.trf.xlu0
    %v333 = vpop.trf.xlu0
    %v334 = vpop.trf.xlu0
    %v335 = vpop.trf.xlu0
    %v336 = vpop.trf.xlu0
    %v337 = vpop.trf.xlu0
    %v338 = vpop.trf.xlu0
    %v339 = vpop.trf.xlu0
    %v340 = vpop.trf.xlu0
    %v341 = vpop.trf.xlu0
    %v342 = vpop.trf.xlu0
    %v343 = vpack.c.bf16 %v231, %v231
    %v344 = vpack.c.bf16 %v263, %v263
    %v345 = vpack.c.bf16 %v295, %v295
    %v346 = vpack.c.bf16 %v327, %v327
    %348 = vrot.lane.b32.xlu0 %v182, 96
    %v349 = vpop.permute.xlu0 %348
    %351 = vxpose.xlu0.b32.start [1/16] %v349, 128
    %352 = vxpose.xlu0.b32.cont [2/16] 0.0, 128
    %353 = vxpose.xlu0.b32.cont [3/16] 0.0, 128
    %354 = vxpose.xlu0.b32.cont [4/16] 0.0, 128
    %355 = vxpose.xlu0.b32.cont [5/16] 0.0, 128
    %356 = vxpose.xlu0.b32.cont [6/16] 0.0, 128
    %357 = vxpose.xlu0.b32.cont [7/16] 0.0, 128
    %358 = vxpose.xlu0.b32.cont [8/16] 0.0, 128
    %359 = vxpose.xlu0.b32.cont [9/16] 0.0, 128
    %360 = vxpose.xlu0.b32.cont [10/16] 0.0, 128
    %361 = vxpose.xlu0.b32.cont [11/16] 0.0, 128
    %362 = vxpose.xlu0.b32.cont [12/16] 0.0, 128
    %363 = vxpose.xlu0.b32.cont [13/16] 0.0, 128
    %364 = vxpose.xlu0.b32.cont [14/16] 0.0, 128
    %365 = vxpose.xlu0.b32.cont [15/16] 0.0, 128
    %366 = vxpose.xlu0.b32.end [16/16] 0.0, 128
    %v367 = vpop.trf.xlu0
    %v368 = vpop.trf.xlu0
    %v369 = vpop.trf.xlu0
    %v370 = vpop.trf.xlu0
    %v371 = vpop.trf.xlu0
    %v372 = vpop.trf.xlu0
    %v373 = vpop.trf.xlu0
    %v374 = vpop.trf.xlu0
    %v375 = vpop.trf.xlu0
    %v376 = vpop.trf.xlu0
    %v377 = vpop.trf.xlu0
    %v378 = vpop.trf.xlu0
    %v379 = vpop.trf.xlu0
    %v380 = vpop.trf.xlu0
    %v381 = vpop.trf.xlu0
    %v382 = vpop.trf.xlu0
    %383 = vxpose.xlu0.b32.start [1/16] %v367, 128
    %384 = vxpose.xlu0.b32.cont [2/16] 0.0, 128
    %385 = vxpose.xlu0.b32.cont [3/16] 0.0, 128
    %386 = vxpose.xlu0.b32.cont [4/16] 0.0, 128
    %387 = vxpose.xlu0.b32.cont [5/16] 0.0, 128
    %388 = vxpose.xlu0.b32.cont [6/16] 0.0, 128
    %389 = vxpose.xlu0.b32.cont [7/16] 0.0, 128
    %390 = vxpose.xlu0.b32.cont [8/16] 0.0, 128
    %391 = vxpose.xlu0.b32.cont [9/16] 0.0, 128
    %392 = vxpose.xlu0.b32.cont [10/16] 0.0, 128
    %393 = vxpose.xlu0.b32.cont [11/16] 0.0, 128
    %394 = vxpose.xlu0.b32.cont [12/16] 0.0, 128
    %395 = vxpose.xlu0.b32.cont [13/16] 0.0, 128
    %396 = vxpose.xlu0.b32.cont [14/16] 0.0, 128
    %397 = vxpose.xlu0.b32.cont [15/16] 0.0, 128
    %398 = vxpose.xlu0.b32.end [16/16] 0.0, 128
    %v399 = vpop.trf.xlu0
    %v400 = vpop.trf.xlu0
    %v401 = vpop.trf.xlu0
    %v402 = vpop.trf.xlu0
    %v403 = vpop.trf.xlu0
    %v404 = vpop.trf.xlu0
    %v405 = vpop.trf.xlu0
    %v406 = vpop.trf.xlu0
    %v407 = vpop.trf.xlu0
    %v408 = vpop.trf.xlu0
    %v409 = vpop.trf.xlu0
    %v410 = vpop.trf.xlu0
    %v411 = vpop.trf.xlu0
    %v412 = vpop.trf.xlu0
    %v413 = vpop.trf.xlu0
    %v414 = vpop.trf.xlu0
    %415 = vxpose.xlu0.b32.start [1/16] %v368, 128
    %416 = vxpose.xlu0.b32.cont [2/16] 0.0, 128
    %417 = vxpose.xlu0.b32.cont [3/16] 0.0, 128
    %418 = vxpose.xlu0.b32.cont [4/16] 0.0, 128
    %419 = vxpose.xlu0.b32.cont [5/16] 0.0, 128
    %420 = vxpose.xlu0.b32.cont [6/16] 0.0, 128
    %421 = vxpose.xlu0.b32.cont [7/16] 0.0, 128
    %422 = vxpose.xlu0.b32.cont [8/16] 0.0, 128
    %423 = vxpose.xlu0.b32.cont [9/16] 0.0, 128
    %424 = vxpose.xlu0.b32.cont [10/16] 0.0, 128
    %425 = vxpose.xlu0.b32.cont [11/16] 0.0, 128
    %426 = vxpose.xlu0.b32.cont [12/16] 0.0, 128
    %427 = vxpose.xlu0.b32.cont [13/16] 0.0, 128
    %428 = vxpose.xlu0.b32.cont [14/16] 0.0, 128
    %429 = vxpose.xlu0.b32.cont [15/16] 0.0, 128
    %430 = vxpose.xlu0.b32.end [16/16] 0.0, 128
    %v431 = vpop.trf.xlu0
    %v432 = vpop.trf.xlu0
    %v433 = vpop.trf.xlu0
    %v434 = vpop.trf.xlu0
    %v435 = vpop.trf.xlu0
    %v436 = vpop.trf.xlu0
    %v437 = vpop.trf.xlu0
    %v438 = vpop.trf.xlu0
    %v439 = vpop.trf.xlu0
    %v440 = vpop.trf.xlu0
    %v441 = vpop.trf.xlu0
    %v442 = vpop.trf.xlu0
    %v443 = vpop.trf.xlu0
    %v444 = vpop.trf.xlu0
    %v445 = vpop.trf.xlu0
    %v446 = vpop.trf.xlu0
    %447 = vxpose.xlu0.b32.start [1/16] %v369, 128
    %448 = vxpose.xlu0.b32.cont [2/16] 0.0, 128
    %449 = vxpose.xlu0.b32.cont [3/16] 0.0, 128
    %450 = vxpose.xlu0.b32.cont [4/16] 0.0, 128
    %451 = vxpose.xlu0.b32.cont [5/16] 0.0, 128
    %452 = vxpose.xlu0.b32.cont [6/16] 0.0, 128
    %453 = vxpose.xlu0.b32.cont [7/16] 0.0, 128
    %454 = vxpose.xlu0.b32.cont [8/16] 0.0, 128
    %455 = vxpose.xlu0.b32.cont [9/16] 0.0, 128
    %456 = vxpose.xlu0.b32.cont [10/16] 0.0, 128
    %457 = vxpose.xlu0.b32.cont [11/16] 0.0, 128
    %458 = vxpose.xlu0.b32.cont [12/16] 0.0, 128
    %459 = vxpose.xlu0.b32.cont [13/16] 0.0, 128
    %460 = vxpose.xlu0.b32.cont [14/16] 0.0, 128
    %461 = vxpose.xlu0.b32.cont [15/16] 0.0, 128
    %462 = vxpose.xlu0.b32.end [16/16] 0.0, 128
    %v463 = vpop.trf.xlu0
    %v464 = vpop.trf.xlu0
    %v465 = vpop.trf.xlu0
    %v466 = vpop.trf.xlu0
    %v467 = vpop.trf.xlu0
    %v468 = vpop.trf.xlu0
    %v469 = vpop.trf.xlu0
    %v470 = vpop.trf.xlu0
    %v471 = vpop.trf.xlu0
    %v472 = vpop.trf.xlu0
    %v473 = vpop.trf.xlu0
    %v474 = vpop.trf.xlu0
    %v475 = vpop.trf.xlu0
    %v476 = vpop.trf.xlu0
    %v477 = vpop.trf.xlu0
    %v478 = vpop.trf.xlu0
    %479 = vxpose.xlu0.b32.start [1/16] %v370, 128
    %480 = vxpose.xlu0.b32.cont [2/16] 0.0, 128
    %481 = vxpose.xlu0.b32.cont [3/16] 0.0, 128
    %482 = vxpose.xlu0.b32.cont [4/16] 0.0, 128
    %483 = vxpose.xlu0.b32.cont [5/16] 0.0, 128
    %484 = vxpose.xlu0.b32.cont [6/16] 0.0, 128
    %485 = vxpose.xlu0.b32.cont [7/16] 0.0, 128
    %486 = vxpose.xlu0.b32.cont [8/16] 0.0, 128
    %487 = vxpose.xlu0.b32.cont [9/16] 0.0, 128
    %488 = vxpose.xlu0.b32.cont [10/16] 0.0, 128
    %489 = vxpose.xlu0.b32.cont [11/16] 0.0, 128
    %490 = vxpose.xlu0.b32.cont [12/16] 0.0, 128
    %491 = vxpose.xlu0.b32.cont [13/16] 0.0, 128
    %492 = vxpose.xlu0.b32.cont [14/16] 0.0, 128
    %493 = vxpose.xlu0.b32.cont [15/16] 0.0, 128
    %494 = vxpose.xlu0.b32.end [16/16] 0.0, 128
    %v495 = vpop.trf.xlu0
    %v496 = vpop.trf.xlu0
    %v497 = vpop.trf.xlu0
    %v498 = vpop.trf.xlu0
    %v499 = vpop.trf.xlu0
    %v500 = vpop.trf.xlu0
    %v501 = vpop.trf.xlu0
    %v502 = vpop.trf.xlu0
    %v503 = vpop.trf.xlu0
    %v504 = vpop.trf.xlu0
    %v505 = vpop.trf.xlu0
    %v506 = vpop.trf.xlu0
    %v507 = vpop.trf.xlu0
    %v508 = vpop.trf.xlu0
    %v509 = vpop.trf.xlu0
    %v510 = vpop.trf.xlu0
    %v511 = vpack.c.bf16 %v399, %v399
    %v512 = vpack.c.bf16 %v431, %v431
    %v513 = vpack.c.bf16 %v463, %v463
    %v514 = vpack.c.bf16 %v495, %v495
    %516 = vrot.lane.b32.xlu0 %v153, 64
    %v517 = vpop.permute.xlu0 %516
    %519 = vxpose.xlu0.b32.start [1/16] %v517, 128
    %520 = vxpose.xlu0.b32.cont [2/16] 0.0, 128
    %521 = vxpose.xlu0.b32.cont [3/16] 0.0, 128
    %522 = vxpose.xlu0.b32.cont [4/16] 0.0, 128
    %523 = vxpose.xlu0.b32.cont [5/16] 0.0, 128
    %524 = vxpose.xlu0.b32.cont [6/16] 0.0, 128
    %525 = vxpose.xlu0.b32.cont [7/16] 0.0, 128
    %526 = vxpose.xlu0.b32.cont [8/16] 0.0, 128
    %527 = vxpose.xlu0.b32.cont [9/16] 0.0, 128
    %528 = vxpose.xlu0.b32.cont [10/16] 0.0, 128
    %529 = vxpose.xlu0.b32.cont [11/16] 0.0, 128
    %530 = vxpose.xlu0.b32.cont [12/16] 0.0, 128
    %531 = vxpose.xlu0.b32.cont [13/16] 0.0, 128
    %532 = vxpose.xlu0.b32.cont [14/16] 0.0, 128
    %533 = vxpose.xlu0.b32.cont [15/16] 0.0, 128
    %534 = vxpose.xlu0.b32.end [16/16] 0.0, 128
    %v535 = vpop.trf.xlu0
    %v536 = vpop.trf.xlu0
    %v537 = vpop.trf.xlu0
    %v538 = vpop.trf.xlu0
    %v539 = vpop.trf.xlu0
    %v540 = vpop.trf.xlu0
    %v541 = vpop.trf.xlu0
    %v542 = vpop.trf.xlu0
    %v543 = vpop.trf.xlu0
    %v544 = vpop.trf.xlu0
    %v545 = vpop.trf.xlu0
    %v546 = vpop.trf.xlu0
    %v547 = vpop.trf.xlu0
    %v548 = vpop.trf.xlu0
    %v549 = vpop.trf.xlu0
    %v550 = vpop.trf.xlu0
    %551 = vxpose.xlu0.b32.start [1/16] %v535, 128
    %552 = vxpose.xlu0.b32.cont [2/16] 0.0, 128
    %553 = vxpose.xlu0.b32.cont [3/16] 0.0, 128
    %554 = vxpose.xlu0.b32.cont [4/16] 0.0, 128
    %555 = vxpose.xlu0.b32.cont [5/16] 0.0, 128
    %556 = vxpose.xlu0.b32.cont [6/16] 0.0, 128
    %557 = vxpose.xlu0.b32.cont [7/16] 0.0, 128
    %558 = vxpose.xlu0.b32.cont [8/16] 0.0, 128
    %559 = vxpose.xlu0.b32.cont [9/16] 0.0, 128
    %560 = vxpose.xlu0.b32.cont [10/16] 0.0, 128
    %561 = vxpose.xlu0.b32.cont [11/16] 0.0, 128
    %562 = vxpose.xlu0.b32.cont [12/16] 0.0, 128
    %563 = vxpose.xlu0.b32.cont [13/16] 0.0, 128
    %564 = vxpose.xlu0.b32.cont [14/16] 0.0, 128
    %565 = vxpose.xlu0.b32.cont [15/16] 0.0, 128
    %566 = vxpose.xlu0.b32.end [16/16] 0.0, 128
    %v567 = vpop.trf.xlu0
    %v568 = vpop.trf.xlu0
    %v569 = vpop.trf.xlu0
    %v570 = vpop.trf.xlu0
    %v571 = vpop.trf.xlu0
    %v572 = vpop.trf.xlu0
    %v573 = vpop.trf.xlu0
    %v574 = vpop.trf.xlu0
    %v575 = vpop.trf.xlu0
    %v576 = vpop.trf.xlu0
    %v577 = vpop.trf.xlu0
    %v578 = vpop.trf.xlu0
    %v579 = vpop.trf.xlu0
    %v580 = vpop.trf.xlu0
    %v581 = vpop.trf.xlu0
    %v582 = vpop.trf.xlu0
    %583 = vxpose.xlu0.b32.start [1/16] %v536, 128
    %584 = vxpose.xlu0.b32.cont [2/16] 0.0, 128
    %585 = vxpose.xlu0.b32.cont [3/16] 0.0, 128
    %586 = vxpose.xlu0.b32.cont [4/16] 0.0, 128
    %587 = vxpose.xlu0.b32.cont [5/16] 0.0, 128
    %588 = vxpose.xlu0.b32.cont [6/16] 0.0, 128
    %589 = vxpose.xlu0.b32.cont [7/16] 0.0, 128
    %590 = vxpose.xlu0.b32.cont [8/16] 0.0, 128
    %591 = vxpose.xlu0.b32.cont [9/16] 0.0, 128
    %592 = vxpose.xlu0.b32.cont [10/16] 0.0, 128
    %593 = vxpose.xlu0.b32.cont [11/16] 0.0, 128
    %594 = vxpose.xlu0.b32.cont [12/16] 0.0, 128
    %595 = vxpose.xlu0.b32.cont [13/16] 0.0, 128
    %596 = vxpose.xlu0.b32.cont [14/16] 0.0, 128
    %597 = vxpose.xlu0.b32.cont [15/16] 0.0, 128
    %598 = vxpose.xlu0.b32.end [16/16] 0.0, 128
    %v599 = vpop.trf.xlu0
    %v600 = vpop.trf.xlu0
    %v601 = vpop.trf.xlu0
    %v602 = vpop.trf.xlu0
    %v603 = vpop.trf.xlu0
    %v604 = vpop.trf.xlu0
    %v605 = vpop.trf.xlu0
    %v606 = vpop.trf.xlu0
    %v607 = vpop.trf.xlu0
    %v608 = vpop.trf.xlu0
    %v609 = vpop.trf.xlu0
    %v610 = vpop.trf.xlu0
    %v611 = vpop.trf.xlu0
    %v612 = vpop.trf.xlu0
    %v613 = vpop.trf.xlu0
    %v614 = vpop.trf.xlu0
    %615 = vxpose.xlu0.b32.start [1/16] %v537, 128
    %616 = vxpose.xlu0.b32.cont [2/16] 0.0, 128
    %617 = vxpose.xlu0.b32.cont [3/16] 0.0, 128
    %618 = vxpose.xlu0.b32.cont [4/16] 0.0, 128
    %619 = vxpose.xlu0.b32.cont [5/16] 0.0, 128
    %620 = vxpose.xlu0.b32.cont [6/16] 0.0, 128
    %621 = vxpose.xlu0.b32.cont [7/16] 0.0, 128
    %622 = vxpose.xlu0.b32.cont [8/16] 0.0, 128
    %623 = vxpose.xlu0.b32.cont [9/16] 0.0, 128
    %624 = vxpose.xlu0.b32.cont [10/16] 0.0, 128
    %625 = vxpose.xlu0.b32.cont [11/16] 0.0, 128
    %626 = vxpose.xlu0.b32.cont [12/16] 0.0, 128
    %627 = vxpose.xlu0.b32.cont [13/16] 0.0, 128
    %628 = vxpose.xlu0.b32.cont [14/16] 0.0, 128
    %629 = vxpose.xlu0.b32.cont [15/16] 0.0, 128
    %630 = vxpose.xlu0.b32.end [16/16] 0.0, 128
    %v631 = vpop.trf.xlu0
    %v632 = vpop.trf.xlu0
    %v633 = vpop.trf.xlu0
    %v634 = vpop.trf.xlu0
    %v635 = vpop.trf.xlu0
    %v636 = vpop.trf.xlu0
    %v637 = vpop.trf.xlu0
    %v638 = vpop.trf.xlu0
    %v639 = vpop.trf.xlu0
    %v640 = vpop.trf.xlu0
    %v641 = vpop.trf.xlu0
    %v642 = vpop.trf.xlu0
    %v643 = vpop.trf.xlu0
    %v644 = vpop.trf.xlu0
    %v645 = vpop.trf.xlu0
    %v646 = vpop.trf.xlu0
    %647 = vxpose.xlu0.b32.start [1/16] %v538, 128
    %648 = vxpose.xlu0.b32.cont [2/16] 0.0, 128
    %649 = vxpose.xlu0.b32.cont [3/16] 0.0, 128
    %650 = vxpose.xlu0.b32.cont [4/16] 0.0, 128
    %651 = vxpose.xlu0.b32.cont [5/16] 0.0, 128
    %652 = vxpose.xlu0.b32.cont [6/16] 0.0, 128
    %653 = vxpose.xlu0.b32.cont [7/16] 0.0, 128
    %654 = vxpose.xlu0.b32.cont [8/16] 0.0, 128
    %655 = vxpose.xlu0.b32.cont [9/16] 0.0, 128
    %656 = vxpose.xlu0.b32.cont [10/16] 0.0, 128
    %657 = vxpose.xlu0.b32.cont [11/16] 0.0, 128
    %658 = vxpose.xlu0.b32.cont [12/16] 0.0, 128
    %659 = vxpose.xlu0.b32.cont [13/16] 0.0, 128
    %660 = vxpose.xlu0.b32.cont [14/16] 0.0, 128
    %661 = vxpose.xlu0.b32.cont [15/16] 0.0, 128
    %662 = vxpose.xlu0.b32.end [16/16] 0.0, 128
    %v663 = vpop.trf.xlu0
    %v664 = vpop.trf.xlu0
    %v665 = vpop.trf.xlu0
    %v666 = vpop.trf.xlu0
    %v667 = vpop.trf.xlu0
    %v668 = vpop.trf.xlu0
    %v669 = vpop.trf.xlu0
    %v670 = vpop.trf.xlu0
    %v671 = vpop.trf.xlu0
    %v672 = vpop.trf.xlu0
    %v673 = vpop.trf.xlu0
    %v674 = vpop.trf.xlu0
    %v675 = vpop.trf.xlu0
    %v676 = vpop.trf.xlu0
    %v677 = vpop.trf.xlu0
    %v678 = vpop.trf.xlu0
    %v679 = vpack.c.bf16 %v567, %v567
    %v680 = vpack.c.bf16 %v599, %v599
    %v681 = vpack.c.bf16 %v631, %v631
    %v682 = vpack.c.bf16 %v663, %v663
    %vm683 = vcmask 64512
    %v685 = vsel %vm683, %v343, 0
    %v688 = vsel %vm683, %v511, 0
    %690 = vmatprep.subr.bf16.mxu0 0
    %691 = vmatpush1.bf16.xpose.msra.mxu0 %v688
    %692 = vmatprep.subr.bf16.mxu0 0
    %693 = vmatpush1.bf16.xpose.msra.mxu0 0
    %694 = vmatprep.subr.bf16.mxu0 0
    %695 = vmatpush1.bf16.xpose.msra.mxu0 0
    %696 = vmatprep.subr.bf16.mxu0 0
    %697 = vmatpush1.bf16.xpose.msra.mxu0 0
    %698 = vmatprep.subr.bf16.mxu0 0
    %699 = vmatpush1.bf16.xpose.msra.mxu0 0
    %700 = vmatprep.subr.bf16.mxu0 0
    %701 = vmatpush1.bf16.xpose.msra.mxu0 0
    %702 = vmatprep.subr.bf16.mxu0 0
    %703 = vmatpush1.bf16.xpose.msra.mxu0 0
    %704 = vmatprep.subr.bf16.mxu0 0
    %705 = vmatpush1.bf16.xpose.msra.mxu0 0
    %706 = vmatprep.subr.bf16.mxu0 0
    %707 = vmatpush1.bf16.xpose.msra.mxu0 0
    %708 = vmatprep.subr.bf16.mxu0 0
    %709 = vmatpush1.bf16.xpose.msra.mxu0 0
    %710 = vmatprep.subr.bf16.mxu0 0
    %711 = vmatpush1.bf16.xpose.msra.mxu0 0
    %712 = vmatprep.subr.bf16.mxu0 0
    %713 = vmatpush1.bf16.xpose.msra.mxu0 0
    %714 = vmatprep.subr.bf16.mxu0 0
    %715 = vmatpush1.bf16.xpose.msra.mxu0 0
    %716 = vmatprep.subr.bf16.mxu0 0
    %717 = vmatpush1.bf16.xpose.msra.mxu0 0
    %718 = vmatprep.subr.bf16.mxu0 0
    %719 = vmatpush1.bf16.xpose.msra.mxu0 0
    %720 = vmatprep.subr.bf16.mxu0 0
    %721 = vmatpush1.bf16.xpose.msra.mxu0 0
    %722 = vmatprep.mubr.bf16.mxu0 0
    %723 = vmatmul.mubr.bf16.gmra.mrb[0].mxu0 %v685
    %v724 = vpop.f32.mrb[0].mxu0
    %v725 = vadd.f32 0.0, %v724
    %v726 = vpop.f32.mrb[0].mxu0
    %v727 = vpop.f32.mrb[0].mxu0
    %v728 = vpop.f32.mrb[0].mxu0
    %729 = vdwg.mxu0
    %v731 = vsel %vm683, %v344, 0
    %v734 = vsel %vm683, %v512, 0
    %736 = vmatprep.subr.bf16.mxu0 0
    %737 = vmatpush1.bf16.xpose.msra.mxu0 %v734
    %738 = vmatprep.subr.bf16.mxu0 0
    %739 = vmatpush1.bf16.xpose.msra.mxu0 0
    %740 = vmatprep.subr.bf16.mxu0 0
    %741 = vmatpush1.bf16.xpose.msra.mxu0 0
    %742 = vmatprep.subr.bf16.mxu0 0
    %743 = vmatpush1.bf16.xpose.msra.mxu0 0
    %744 = vmatprep.subr.bf16.mxu0 0
    %745 = vmatpush1.bf16.xpose.msra.mxu0 0
    %746 = vmatprep.subr.bf16.mxu0 0
    %747 = vmatpush1.bf16.xpose.msra.mxu0 0
    %748 = vmatprep.subr.bf16.mxu0 0
    %749 = vmatpush1.bf16.xpose.msra.mxu0 0
    %750 = vmatprep.subr.bf16.mxu0 0
    %751 = vmatpush1.bf16.xpose.msra.mxu0 0
    %752 = vmatprep.subr.bf16.mxu0 0
    %753 = vmatpush1.bf16.xpose.msra.mxu0 0
    %754 = vmatprep.subr.bf16.mxu0 0
    %755 = vmatpush1.bf16.xpose.msra.mxu0 0
    %756 = vmatprep.subr.bf16.mxu0 0
    %757 = vmatpush1.bf16.xpose.msra.mxu0 0
    %758 = vmatprep.subr.bf16.mxu0 0
    %759 = vmatpush1.bf16.xpose.msra.mxu0 0
    %760 = vmatprep.subr.bf16.mxu0 0
    %761 = vmatpush1.bf16.xpose.msra.mxu0 0
    %762 = vmatprep.subr.bf16.mxu0 0
    %763 = vmatpush1.bf16.xpose.msra.mxu0 0
    %764 = vmatprep.subr.bf16.mxu0 0
    %765 = vmatpush1.bf16.xpose.msra.mxu0 0
    %766 = vmatprep.subr.bf16.mxu0 0
    %767 = vmatpush1.bf16.xpose.msra.mxu0 0
    %768 = vmatprep.mubr.bf16.mxu0 0
    %769 = vmatmul.mubr.bf16.gmra.mrb[0].mxu0 %v731
    %v770 = vpop.f32.mrb[0].mxu0
    %v771 = vadd.f32 0.0, %v770
    %v772 = vpop.f32.mrb[0].mxu0
    %v773 = vpop.f32.mrb[0].mxu0
    %v774 = vpop.f32.mrb[0].mxu0
    %775 = vdwg.mxu0
    %v777 = vsel %vm683, %v345, 0
    %v780 = vsel %vm683, %v513, 0
    %782 = vmatprep.subr.bf16.mxu0 0
    %783 = vmatpush1.bf16.xpose.msra.mxu0 %v780
    %784 = vmatprep.subr.bf16.mxu0 0
    %785 = vmatpush1.bf16.xpose.msra.mxu0 0
    %786 = vmatprep.subr.bf16.mxu0 0
    %787 = vmatpush1.bf16.xpose.msra.mxu0 0
    %788 = vmatprep.subr.bf16.mxu0 0
    %789 = vmatpush1.bf16.xpose.msra.mxu0 0
    %790 = vmatprep.subr.bf16.mxu0 0
    %791 = vmatpush1.bf16.xpose.msra.mxu0 0
    %792 = vmatprep.subr.bf16.mxu0 0
    %793 = vmatpush1.bf16.xpose.msra.mxu0 0
    %794 = vmatprep.subr.bf16.mxu0 0
    %795 = vmatpush1.bf16.xpose.msra.mxu0 0
    %796 = vmatprep.subr.bf16.mxu0 0
    %797 = vmatpush1.bf16.xpose.msra.mxu0 0
    %798 = vmatprep.subr.bf16.mxu0 0
    %799 = vmatpush1.bf16.xpose.msra.mxu0 0
    %800 = vmatprep.subr.bf16.mxu0 0
    %801 = vmatpush1.bf16.xpose.msra.mxu0 0
    %802 = vmatprep.subr.bf16.mxu0 0
    %803 = vmatpush1.bf16.xpose.msra.mxu0 0
    %804 = vmatprep.subr.bf16.mxu0 0
    %805 = vmatpush1.bf16.xpose.msra.mxu0 0
    %806 = vmatprep.subr.bf16.mxu0 0
    %807 = vmatpush1.bf16.xpose.msra.mxu0 0
    %808 = vmatprep.subr.bf16.mxu0 0
    %809 = vmatpush1.bf16.xpose.msra.mxu0 0
    %810 = vmatprep.subr.bf16.mxu0 0
    %811 = vmatpush1.bf16.xpose.msra.mxu0 0
    %812 = vmatprep.subr.bf16.mxu0 0
    %813 = vmatpush1.bf16.xpose.msra.mxu0 0
    %814 = vmatprep.mubr.bf16.mxu0 0
    %815 = vmatmul.mubr.bf16.gmra.mrb[0].mxu0 %v777
    %v816 = vpop.f32.mrb[0].mxu0
    %v817 = vadd.f32 0.0, %v816
    %v818 = vpop.f32.mrb[0].mxu0
    %v819 = vpop.f32.mrb[0].mxu0
    %v820 = vpop.f32.mrb[0].mxu0
    %821 = vdwg.mxu0
    %v823 = vsel %vm683, %v346, 0
    %v826 = vsel %vm683, %v514, 0
    %828 = vmatprep.subr.bf16.mxu0 0
    %829 = vmatpush1.bf16.xpose.msra.mxu0 %v826
    %830 = vmatprep.subr.bf16.mxu0 0
    %831 = vmatpush1.bf16.xpose.msra.mxu0 0
    %832 = vmatprep.subr.bf16.mxu0 0
    %833 = vmatpush1.bf16.xpose.msra.mxu0 0
    %834 = vmatprep.subr.bf16.mxu0 0
    %835 = vmatpush1.bf16.xpose.msra.mxu0 0
    %836 = vmatprep.subr.bf16.mxu0 0
    %837 = vmatpush1.bf16.xpose.msra.mxu0 0
    %838 = vmatprep.subr.bf16.mxu0 0
    %839 = vmatpush1.bf16.xpose.msra.mxu0 0
    %840 = vmatprep.subr.bf16.mxu0 0
    %841 = vmatpush1.bf16.xpose.msra.mxu0 0
    %842 = vmatprep.subr.bf16.mxu0 0
    %843 = vmatpush1.bf16.xpose.msra.mxu0 0
    %844 = vmatprep.subr.bf16.mxu0 0
    %845 = vmatpush1.bf16.xpose.msra.mxu0 0
    %846 = vmatprep.subr.bf16.mxu0 0
    %847 = vmatpush1.bf16.xpose.msra.mxu0 0
    %848 = vmatprep.subr.bf16.mxu0 0
    %849 = vmatpush1.bf16.xpose.msra.mxu0 0
    %850 = vmatprep.subr.bf16.mxu0 0
    %851 = vmatpush1.bf16.xpose.msra.mxu0 0
    %852 = vmatprep.subr.bf16.mxu0 0
    %853 = vmatpush1.bf16.xpose.msra.mxu0 0
    %854 = vmatprep.subr.bf16.mxu0 0
    %855 = vmatpush1.bf16.xpose.msra.mxu0 0
    %856 = vmatprep.subr.bf16.mxu0 0
    %857 = vmatpush1.bf16.xpose.msra.mxu0 0
    %858 = vmatprep.subr.bf16.mxu0 0
    %859 = vmatpush1.bf16.xpose.msra.mxu0 0
    %860 = vmatprep.mubr.bf16.mxu0 0
    %861 = vmatmul.mubr.bf16.gmra.mrb[0].mxu0 %v823
    %v862 = vpop.f32.mrb[0].mxu0
    %v863 = vadd.f32 0.0, %v862
    %v864 = vpop.f32.mrb[0].mxu0
    %v865 = vpop.f32.mrb[0].mxu0
    %v866 = vpop.f32.mrb[0].mxu0
    %867 = vdwg.mxu0
    %v868 = vlaneseq
    %v869 = vshrl.u32 %v868, 7
    %v870 = vlaneseq
    %v871 = vand.u32 %v870, 127
    %vm872 = vcmp.le.s32.totalorder %v871, %v869
    %v873 = vsel %vm872, %v725, -1e+30
    %v874 = vsel %vm872, %v771, -1e+30
    %v875 = vsel %vm872, %v817, -1e+30
    %v876 = vsel %vm872, %v863, -1e+30
    %v877 = vsel %vm683, %v873, -inf
    %878 = vmax.xlane.f32.xlu0 %v877
    %v879 = vpop.xlane.xlu0 %878
    %v880 = vsel %vm683, %v874, -inf
    %881 = vmax.xlane.f32.xlu0 %v880
    %v882 = vpop.xlane.xlu0 %881
    %v883 = vsel %vm683, %v875, -inf
    %884 = vmax.xlane.f32.xlu0 %v883
    %v885 = vpop.xlane.xlu0 %884
    %v886 = vsel %vm683, %v876, -inf
    %887 = vmax.xlane.f32.xlu0 %v886
    %v888 = vpop.xlane.xlu0 %887
    %v889 = vsub.f32 %v873, %v879
    %v890 = vsub.f32 %v874, %v882
    %v891 = vsub.f32 %v875, %v885
    %v892 = vsub.f32 %v876, %v888
    %v893 = vmul.f32 %v889, 1.442695
    %v894 = vpow.pop %v893
    %v895 = vmul.f32 %v890, 1.442695
    %v896 = vpow.pop %v895
    %v897 = vmul.f32 %v891, 1.442695
    %v898 = vpow.pop %v897
    %v899 = vmul.f32 %v892, 1.442695
    %v900 = vpow.pop %v899
    %v901 = vsel %vm683, %v894, 0.0
    %902 = vadd.xlane.f32.xlu0 %v901
    %v903 = vpop.xlane.xlu0 %902
    %v904 = vsel %vm683, %v896, 0.0
    %905 = vadd.xlane.f32.xlu0 %v904
    %v906 = vpop.xlane.xlu0 %905
    %v907 = vsel %vm683, %v898, 0.0
    %908 = vadd.xlane.f32.xlu0 %v907
    %v909 = vpop.xlane.xlu0 %908
    %v910 = vsel %vm683, %v900, 0.0
    %911 = vadd.xlane.f32.xlu0 %v910
    %v912 = vpop.xlane.xlu0 %911
    %v913 = vrcp.pop %v903
    %v914 = vrcp.pop %v906
    %v915 = vrcp.pop %v909
    %v916 = vrcp.pop %v912
    %v917 = vmul.f32 %v894, %v913
    %v918 = vmul.f32 %v896, %v914
    %v919 = vmul.f32 %v898, %v915
    %v920 = vmul.f32 %v900, %v916
    %v921 = vpack.c.bf16 %v917, %v917
    %v922 = vpack.c.bf16 %v918, %v918
    %v923 = vpack.c.bf16 %v919, %v919
    %v924 = vpack.c.bf16 %v920, %v920
    %v926 = vsel %vm683, %v921, 0
    %vm928 = vcmask 1043456
    %v930 = vsel %vm928, %v679, 0
    %932 = vmatprep.subr.bf16.mxu0 0
    %933 = vmatpush1.bf16.msra.mxu0 %v930
    %934 = vmatprep.subr.bf16.mxu0 0
    %935 = vmatpush1.bf16.msra.mxu0 0
    %936 = vmatprep.subr.bf16.mxu0 0
    %937 = vmatpush1.bf16.msra.mxu0 0
    %938 = vmatprep.subr.bf16.mxu0 0
    %939 = vmatpush1.bf16.msra.mxu0 0
    %940 = vmatprep.subr.bf16.mxu0 0
    %941 = vmatpush1.bf16.msra.mxu0 0
    %942 = vmatprep.subr.bf16.mxu0 0
    %943 = vmatpush1.bf16.msra.mxu0 0
    %944 = vmatprep.subr.bf16.mxu0 0
    %945 = vmatpush1.bf16.msra.mxu0 0
    %946 = vmatprep.subr.bf16.mxu0 0
    %947 = vmatpush1.bf16.msra.mxu0 0
    %948 = vmatprep.subr.bf16.mxu0 0
    %949 = vmatpush1.bf16.msra.mxu0 0
    %950 = vmatprep.subr.bf16.mxu0 0
    %951 = vmatpush1.bf16.msra.mxu0 0
    %952 = vmatprep.subr.bf16.mxu0 0
    %953 = vmatpush1.bf16.msra.mxu0 0
    %954 = vmatprep.subr.bf16.mxu0 0
    %955 = vmatpush1.bf16.msra.mxu0 0
    %956 = vmatprep.subr.bf16.mxu0 0
    %957 = vmatpush1.bf16.msra.mxu0 0
    %958 = vmatprep.subr.bf16.mxu0 0
    %959 = vmatpush1.bf16.msra.mxu0 0
    %960 = vmatprep.subr.bf16.mxu0 0
    %961 = vmatpush1.bf16.msra.mxu0 0
    %962 = vmatprep.subr.bf16.mxu0 0
    %963 = vmatpush1.bf16.msra.mxu0 0
    %964 = vmatprep.mubr.bf16.mxu0 0
    %965 = vmatmul.mubr.bf16.gmra.mrb[0].mxu0 %v926
    %v966 = vpop.f32.mrb[0].mxu0
    %v967 = vadd.f32 0.0, %v966
    %v968 = vpop.f32.mrb[0].mxu0
    %v969 = vpop.f32.mrb[0].mxu0
    %v970 = vpop.f32.mrb[0].mxu0
    %971 = vdwg.mxu0
    %v973 = vsel %vm683, %v922, 0
    %v976 = vsel %vm928, %v680, 0
    %978 = vmatprep.subr.bf16.mxu0 0
    %979 = vmatpush1.bf16.msra.mxu0 %v976
    %980 = vmatprep.subr.bf16.mxu0 0
    %981 = vmatpush1.bf16.msra.mxu0 0
    %982 = vmatprep.subr.bf16.mxu0 0
    %983 = vmatpush1.bf16.msra.mxu0 0
    %984 = vmatprep.subr.bf16.mxu0 0
    %985 = vmatpush1.bf16.msra.mxu0 0
    %986 = vmatprep.subr.bf16.mxu0 0
    %987 = vmatpush1.bf16.msra.mxu0 0
    %988 = vmatprep.subr.bf16.mxu0 0
    %989 = vmatpush1.bf16.msra.mxu0 0
    %990 = vmatprep.subr.bf16.mxu0 0
    %991 = vmatpush1.bf16.msra.mxu0 0
    %992 = vmatprep.subr.bf16.mxu0 0
    %993 = vmatpush1.bf16.msra.mxu0 0
    %994 = vmatprep.subr.bf16.mxu0 0
    %995 = vmatpush1.bf16.msra.mxu0 0
    %996 = vmatprep.subr.bf16.mxu0 0
    %997 = vmatpush1.bf16.msra.mxu0 0
    %998 = vmatprep.subr.bf16.mxu0 0
    %999 = vmatpush1.bf16.msra.mxu0 0
    %1000 = vmatprep.subr.bf16.mxu0 0
    %1001 = vmatpush1.bf16.msra.mxu0 0
    %1002 = vmatprep.subr.bf16.mxu0 0
    %1003 = vmatpush1.bf16.msra.mxu0 0
    %1004 = vmatprep.subr.bf16.mxu0 0
    %1005 = vmatpush1.bf16.msra.mxu0 0
    %1006 = vmatprep.subr.bf16.mxu0 0
    %1007 = vmatpush1.bf16.msra.mxu0 0
    %1008 = vmatprep.subr.bf16.mxu0 0
    %1009 = vmatpush1.bf16.msra.mxu0 0
    %1010 = vmatprep.mubr.bf16.mxu0 0
    %1011 = vmatmul.mubr.bf16.gmra.mrb[0].mxu0 %v973
    %v1012 = vpop.f32.mrb[0].mxu0
    %v1013 = vadd.f32 0.0, %v1012
    %v1014 = vpop.f32.mrb[0].mxu0
    %v1015 = vpop.f32.mrb[0].mxu0
    %v1016 = vpop.f32.mrb[0].mxu0
    %1017 = vdwg.mxu0
    %v1019 = vsel %vm683, %v923, 0
    %v1022 = vsel %vm928, %v681, 0
    %1024 = vmatprep.subr.bf16.mxu0 0
    %1025 = vmatpush1.bf16.msra.mxu0 %v1022
    %1026 = vmatprep.subr.bf16.mxu0 0
    %1027 = vmatpush1.bf16.msra.mxu0 0
    %1028 = vmatprep.subr.bf16.mxu0 0
    %1029 = vmatpush1.bf16.msra.mxu0 0
    %1030 = vmatprep.subr.bf16.mxu0 0
    %1031 = vmatpush1.bf16.msra.mxu0 0
    %1032 = vmatprep.subr.bf16.mxu0 0
    %1033 = vmatpush1.bf16.msra.mxu0 0
    %1034 = vmatprep.subr.bf16.mxu0 0
    %1035 = vmatpush1.bf16.msra.mxu0 0
    %1036 = vmatprep.subr.bf16.mxu0 0
    %1037 = vmatpush1.bf16.msra.mxu0 0
    %1038 = vmatprep.subr.bf16.mxu0 0
    %1039 = vmatpush1.bf16.msra.mxu0 0
    %1040 = vmatprep.subr.bf16.mxu0 0
    %1041 = vmatpush1.bf16.msra.mxu0 0
    %1042 = vmatprep.subr.bf16.mxu0 0
    %1043 = vmatpush1.bf16.msra.mxu0 0
    %1044 = vmatprep.subr.bf16.mxu0 0
    %1045 = vmatpush1.bf16.msra.mxu0 0
    %1046 = vmatprep.subr.bf16.mxu0 0
    %1047 = vmatpush1.bf16.msra.mxu0 0
    %1048 = vmatprep.subr.bf16.mxu0 0
    %1049 = vmatpush1.bf16.msra.mxu0 0
    %1050 = vmatprep.subr.bf16.mxu0 0
    %1051 = vmatpush1.bf16.msra.mxu0 0
    %1052 = vmatprep.subr.bf16.mxu0 0
    %1053 = vmatpush1.bf16.msra.mxu0 0
    %1054 = vmatprep.subr.bf16.mxu0 0
    %1055 = vmatpush1.bf16.msra.mxu0 0
    %1056 = vmatprep.mubr.bf16.mxu0 0
    %1057 = vmatmul.mubr.bf16.gmra.mrb[0].mxu0 %v1019
    %v1058 = vpop.f32.mrb[0].mxu0
    %v1059 = vadd.f32 0.0, %v1058
    %v1060 = vpop.f32.mrb[0].mxu0
    %v1061 = vpop.f32.mrb[0].mxu0
    %v1062 = vpop.f32.mrb[0].mxu0
    %1063 = vdwg.mxu0
    %v1065 = vsel %vm683, %v924, 0
    %v1068 = vsel %vm928, %v682, 0
    %1070 = vmatprep.subr.bf16.mxu0 0
    %1071 = vmatpush1.bf16.msra.mxu0 %v1068
    %1072 = vmatprep.subr.bf16.mxu0 0
    %1073 = vmatpush1.bf16.msra.mxu0 0
    %1074 = vmatprep.subr.bf16.mxu0 0
    %1075 = vmatpush1.bf16.msra.mxu0 0
    %1076 = vmatprep.subr.bf16.mxu0 0
    %1077 = vmatpush1.bf16.msra.mxu0 0
    %1078 = vmatprep.subr.bf16.mxu0 0
    %1079 = vmatpush1.bf16.msra.mxu0 0
    %1080 = vmatprep.subr.bf16.mxu0 0
    %1081 = vmatpush1.bf16.msra.mxu0 0
    %1082 = vmatprep.subr.bf16.mxu0 0
    %1083 = vmatpush1.bf16.msra.mxu0 0
    %1084 = vmatprep.subr.bf16.mxu0 0
    %1085 = vmatpush1.bf16.msra.mxu0 0
    %1086 = vmatprep.subr.bf16.mxu0 0
    %1087 = vmatpush1.bf16.msra.mxu0 0
    %1088 = vmatprep.subr.bf16.mxu0 0
    %1089 = vmatpush1.bf16.msra.mxu0 0
    %1090 = vmatprep.subr.bf16.mxu0 0
    %1091 = vmatpush1.bf16.msra.mxu0 0
    %1092 = vmatprep.subr.bf16.mxu0 0
    %1093 = vmatpush1.bf16.msra.mxu0 0
    %1094 = vmatprep.subr.bf16.mxu0 0
    %1095 = vmatpush1.bf16.msra.mxu0 0
    %1096 = vmatprep.subr.bf16.mxu0 0
    %1097 = vmatpush1.bf16.msra.mxu0 0
    %1098 = vmatprep.subr.bf16.mxu0 0
    %1099 = vmatpush1.bf16.msra.mxu0 0
    %1100 = vmatprep.subr.bf16.mxu0 0
    %1101 = vmatpush1.bf16.msra.mxu0 0
    %1102 = vmatprep.mubr.bf16.mxu0 0
    %1103 = vmatmul.mubr.bf16.gmra.mrb[0].mxu0 %v1065
    %v1104 = vpop.f32.mrb[0].mxu0
    %v1105 = vadd.f32 0.0, %v1104
    %v1106 = vpop.f32.mrb[0].mxu0
    %v1107 = vpop.f32.mrb[0].mxu0
    %v1108 = vpop.f32.mrb[0].mxu0
    %1109 = vdwg.mxu0
    %1110 = vxpose.xlu0.b32.start [1/16] %v967, 128
    %1111 = vxpose.xlu0.b32.cont [2/16] 0.0, 128
    %1112 = vxpose.xlu0.b32.cont [3/16] 0.0, 128
    %1113 = vxpose.xlu0.b32.cont [4/16] 0.0, 128
    %1114 = vxpose.xlu0.b32.cont [5/16] 0.0, 128
    %1115 = vxpose.xlu0.b32.cont [6/16] 0.0, 128
    %1116 = vxpose.xlu0.b32.cont [7/16] 0.0, 128
    %1117 = vxpose.xlu0.b32.cont [8/16] 0.0, 128
    %1118 = vxpose.xlu0.b32.cont [9/16] 0.0, 128
    %1119 = vxpose.xlu0.b32.cont [10/16] 0.0, 128
    %1120 = vxpose.xlu0.b32.cont [11/16] 0.0, 128
    %1121 = vxpose.xlu0.b32.cont [12/16] 0.0, 128
    %1122 = vxpose.xlu0.b32.cont [13/16] 0.0, 128
    %1123 = vxpose.xlu0.b32.cont [14/16] 0.0, 128
    %1124 = vxpose.xlu0.b32.cont [15/16] 0.0, 128
    %1125 = vxpose.xlu0.b32.end [16/16] 0.0, 128
    %v1126 = vpop.trf.xlu0
    %v1127 = vpop.trf.xlu0
    %v1128 = vpop.trf.xlu0
    %v1129 = vpop.trf.xlu0
    %v1130 = vpop.trf.xlu0
    %v1131 = vpop.trf.xlu0
    %v1132 = vpop.trf.xlu0
    %v1133 = vpop.trf.xlu0
    %v1134 = vpop.trf.xlu0
    %v1135 = vpop.trf.xlu0
    %v1136 = vpop.trf.xlu0
    %v1137 = vpop.trf.xlu0
    %v1138 = vpop.trf.xlu0
    %v1139 = vpop.trf.xlu0
    %v1140 = vpop.trf.xlu0
    %v1141 = vpop.trf.xlu0
    %1142 = vxpose.xlu0.b32.start [1/16] %v1013, 128
    %1143 = vxpose.xlu0.b32.cont [2/16] 0.0, 128
    %1144 = vxpose.xlu0.b32.cont [3/16] 0.0, 128
    %1145 = vxpose.xlu0.b32.cont [4/16] 0.0, 128
    %1146 = vxpose.xlu0.b32.cont [5/16] 0.0, 128
    %1147 = vxpose.xlu0.b32.cont [6/16] 0.0, 128
    %1148 = vxpose.xlu0.b32.cont [7/16] 0.0, 128
    %1149 = vxpose.xlu0.b32.cont [8/16] 0.0, 128
    %1150 = vxpose.xlu0.b32.cont [9/16] 0.0, 128
    %1151 = vxpose.xlu0.b32.cont [10/16] 0.0, 128
    %1152 = vxpose.xlu0.b32.cont [11/16] 0.0, 128
    %1153 = vxpose.xlu0.b32.cont [12/16] 0.0, 128
    %1154 = vxpose.xlu0.b32.cont [13/16] 0.0, 128
    %1155 = vxpose.xlu0.b32.cont [14/16] 0.0, 128
    %1156 = vxpose.xlu0.b32.cont [15/16] 0.0, 128
    %1157 = vxpose.xlu0.b32.end [16/16] 0.0, 128
    %v1158 = vpop.trf.xlu0
    %v1159 = vpop.trf.xlu0
    %v1160 = vpop.trf.xlu0
    %v1161 = vpop.trf.xlu0
    %v1162 = vpop.trf.xlu0
    %v1163 = vpop.trf.xlu0
    %v1164 = vpop.trf.xlu0
    %v1165 = vpop.trf.xlu0
    %v1166 = vpop.trf.xlu0
    %v1167 = vpop.trf.xlu0
    %v1168 = vpop.trf.xlu0
    %v1169 = vpop.trf.xlu0
    %v1170 = vpop.trf.xlu0
    %v1171 = vpop.trf.xlu0
    %v1172 = vpop.trf.xlu0
    %v1173 = vpop.trf.xlu0
    %1174 = vxpose.xlu0.b32.start [1/16] %v1059, 128
    %1175 = vxpose.xlu0.b32.cont [2/16] 0.0, 128
    %1176 = vxpose.xlu0.b32.cont [3/16] 0.0, 128
    %1177 = vxpose.xlu0.b32.cont [4/16] 0.0, 128
    %1178 = vxpose.xlu0.b32.cont [5/16] 0.0, 128
    %1179 = vxpose.xlu0.b32.cont [6/16] 0.0, 128
    %1180 = vxpose.xlu0.b32.cont [7/16] 0.0, 128
    %1181 = vxpose.xlu0.b32.cont [8/16] 0.0, 128
    %1182 = vxpose.xlu0.b32.cont [9/16] 0.0, 128
    %1183 = vxpose.xlu0.b32.cont [10/16] 0.0, 128
    %1184 = vxpose.xlu0.b32.cont [11/16] 0.0, 128
    %1185 = vxpose.xlu0.b32.cont [12/16] 0.0, 128
    %1186 = vxpose.xlu0.b32.cont [13/16] 0.0, 128
    %1187 = vxpose.xlu0.b32.cont [14/16] 0.0, 128
    %1188 = vxpose.xlu0.b32.cont [15/16] 0.0, 128
    %1189 = vxpose.xlu0.b32.end [16/16] 0.0, 128
    %v1190 = vpop.trf.xlu0
    %v1191 = vpop.trf.xlu0
    %v1192 = vpop.trf.xlu0
    %v1193 = vpop.trf.xlu0
    %v1194 = vpop.trf.xlu0
    %v1195 = vpop.trf.xlu0
    %v1196 = vpop.trf.xlu0
    %v1197 = vpop.trf.xlu0
    %v1198 = vpop.trf.xlu0
    %v1199 = vpop.trf.xlu0
    %v1200 = vpop.trf.xlu0
    %v1201 = vpop.trf.xlu0
    %v1202 = vpop.trf.xlu0
    %v1203 = vpop.trf.xlu0
    %v1204 = vpop.trf.xlu0
    %v1205 = vpop.trf.xlu0
    %1206 = vxpose.xlu0.b32.start [1/16] %v1105, 128
    %1207 = vxpose.xlu0.b32.cont [2/16] 0.0, 128
    %1208 = vxpose.xlu0.b32.cont [3/16] 0.0, 128
    %1209 = vxpose.xlu0.b32.cont [4/16] 0.0, 128
    %1210 = vxpose.xlu0.b32.cont [5/16] 0.0, 128
    %1211 = vxpose.xlu0.b32.cont [6/16] 0.0, 128
    %1212 = vxpose.xlu0.b32.cont [7/16] 0.0, 128
    %1213 = vxpose.xlu0.b32.cont [8/16] 0.0, 128
    %1214 = vxpose.xlu0.b32.cont [9/16] 0.0, 128
    %1215 = vxpose.xlu0.b32.cont [10/16] 0.0, 128
    %1216 = vxpose.xlu0.b32.cont [11/16] 0.0, 128
    %1217 = vxpose.xlu0.b32.cont [12/16] 0.0, 128
    %1218 = vxpose.xlu0.b32.cont [13/16] 0.0, 128
    %1219 = vxpose.xlu0.b32.cont [14/16] 0.0, 128
    %1220 = vxpose.xlu0.b32.cont [15/16] 0.0, 128
    %1221 = vxpose.xlu0.b32.end [16/16] 0.0, 128
    %v1222 = vpop.trf.xlu0
    %v1223 = vpop.trf.xlu0
    %v1224 = vpop.trf.xlu0
    %v1225 = vpop.trf.xlu0
    %v1226 = vpop.trf.xlu0
    %v1227 = vpop.trf.xlu0
    %v1228 = vpop.trf.xlu0
    %v1229 = vpop.trf.xlu0
    %v1230 = vpop.trf.xlu0
    %v1231 = vpop.trf.xlu0
    %v1232 = vpop.trf.xlu0
    %v1233 = vpop.trf.xlu0
    %v1234 = vpop.trf.xlu0
    %v1235 = vpop.trf.xlu0
    %v1236 = vpop.trf.xlu0
    %v1237 = vpop.trf.xlu0
    %1238 = vxpose.xlu0.b32.start [1/16] %v1126, 128
    %1239 = vxpose.xlu0.b32.cont [2/16] %v1158, 128
    %1240 = vxpose.xlu0.b32.cont [3/16] %v1190, 128
    %1241 = vxpose.xlu0.b32.cont [4/16] %v1222, 128
    %1242 = vxpose.xlu0.b32.cont [5/16] 0.0, 128
    %1243 = vxpose.xlu0.b32.cont [6/16] 0.0, 128
    %1244 = vxpose.xlu0.b32.cont [7/16] 0.0, 128
    %1245 = vxpose.xlu0.b32.cont [8/16] 0.0, 128
    %1246 = vxpose.xlu0.b32.cont [9/16] 0.0, 128
    %1247 = vxpose.xlu0.b32.cont [10/16] 0.0, 128
    %1248 = vxpose.xlu0.b32.cont [11/16] 0.0, 128
    %1249 = vxpose.xlu0.b32.cont [12/16] 0.0, 128
    %1250 = vxpose.xlu0.b32.cont [13/16] 0.0, 128
    %1251 = vxpose.xlu0.b32.cont [14/16] 0.0, 128
    %1252 = vxpose.xlu0.b32.cont [15/16] 0.0, 128
    %1253 = vxpose.xlu0.b32.end [16/16] 0.0, 128
    %v1254 = vpop.trf.xlu0
    %v1255 = vpop.trf.xlu0
    %v1256 = vpop.trf.xlu0
    %v1257 = vpop.trf.xlu0
    %v1258 = vpop.trf.xlu0
    %v1259 = vpop.trf.xlu0
    %v1260 = vpop.trf.xlu0
    %v1261 = vpop.trf.xlu0
    %v1262 = vpop.trf.xlu0
    %v1263 = vpop.trf.xlu0
    %v1264 = vpop.trf.xlu0
    %v1265 = vpop.trf.xlu0
    %v1266 = vpop.trf.xlu0
    %v1267 = vpop.trf.xlu0
    %v1268 = vpop.trf.xlu0
    %v1269 = vpop.trf.xlu0
    %v1270 = vpack.c.bf16 %v1254, %v1254
    %v1271 = vld [vmem:[%s4] sm:$0xf]
    %v1272 = vld [vmem:[%s4 + $0x4] sm:$0xf]
    %v1273 = vld [vmem:[%s4 + $0x8] sm:$0xf]
    %v1274 = vld [vmem:[%s4 + $0xc] sm:$0xf]
    %v1279 = vunpack.c.l.b16 %v1271
    %v1280 = vunpack.c.l.b16 %v1272
    %v1281 = vunpack.c.l.b16 %v1273
    %v1282 = vunpack.c.l.b16 %v1274
    %v1283 = vpack.c.b16 %v1280, %v1279
    %v1284 = vpack.c.b16 %v1282, %v1281
    %v1288 = vsel %vm73, %v1270, 0
    %1290 = vmatprep.subr.bf16.mxu0 0
    %1291 = vmatpush1.bf16.msra.mxu0 %v1283
    %1292 = vmatprep.subr.bf16.mxu0 0
    %1293 = vmatpush1.bf16.msra.mxu0 %v1284
    %1294 = vmatprep.subr.bf16.mxu0 0
    %1295 = vmatpush1.bf16.msra.mxu0 0
    %1296 = vmatprep.subr.bf16.mxu0 0
    %1297 = vmatpush1.bf16.msra.mxu0 0
    %1298 = vmatprep.subr.bf16.mxu0 0
    %1299 = vmatpush1.bf16.msra.mxu0 0
    %1300 = vmatprep.subr.bf16.mxu0 0
    %1301 = vmatpush1.bf16.msra.mxu0 0
    %1302 = vmatprep.subr.bf16.mxu0 0
    %1303 = vmatpush1.bf16.msra.mxu0 0
    %1304 = vmatprep.subr.bf16.mxu0 0
    %1305 = vmatpush1.bf16.msra.mxu0 0
    %1306 = vmatprep.subr.bf16.mxu0 0
    %1307 = vmatpush1.bf16.msra.mxu0 0
    %1308 = vmatprep.subr.bf16.mxu0 0
    %1309 = vmatpush1.bf16.msra.mxu0 0
    %1310 = vmatprep.subr.bf16.mxu0 0
    %1311 = vmatpush1.bf16.msra.mxu0 0
    %1312 = vmatprep.subr.bf16.mxu0 0
    %1313 = vmatpush1.bf16.msra.mxu0 0
    %1314 = vmatprep.subr.bf16.mxu0 0
    %1315 = vmatpush1.bf16.msra.mxu0 0
    %1316 = vmatprep.subr.bf16.mxu0 0
    %1317 = vmatpush1.bf16.msra.mxu0 0
    %1318 = vmatprep.subr.bf16.mxu0 0
    %1319 = vmatpush1.bf16.msra.mxu0 0
    %1320 = vmatprep.subr.bf16.mxu0 0
    %1321 = vmatpush1.bf16.msra.mxu0 0
    %1322 = vmatprep.mubr.bf16.mxu0 0
    %1323 = vmatmul.mubr.bf16.gmra.mrb[0].mxu0 %v1288
    %v1324 = vpop.f32.mrb[0].mxu0
    %v1325 = vadd.f32 0.0, %v1324
    %v1326 = vpop.f32.mrb[0].mxu0
    %v1327 = vpop.f32.mrb[0].mxu0
    %v1328 = vpop.f32.mrb[0].mxu0
    %1329 = vdwg.mxu0
    %v1330 = vadd.f32 %v71, %v1325
    %v1331 = vmul.f32 %v1330, %v1330
    %v1332 = vsel %vm73, %v1331, 0.0
    %1333 = vadd.xlane.f32.xlu0 %v1332
    %v1334 = vpop.xlane.xlu0 %1333
    %v1335 = vmul.f32 %v1334, %v77
    %v1336 = vadd.f32 %v1335, 1e-06
    %v1337 = vrsqrt.pop %v1336
    %v1338 = vmul.f32 %v1330, %v1337
    %v1339 = vld [vmem:[%s2] sm:$0x1]
    %v1341 = vlaneseq
    %v1342 = vshrl.u32 %v1341, 7
    %v1343 = vsub.s32 0, %v1342
    %v1344 = vrot.slane %v1339, %v1343
    %v1346 = vmul.f32 %v1338, %v1344
    %v1347 = vpack.c.bf16 %v1346, %v1346
    %v1348 = vld [vmem:[#allocation5] sm:$0xf]
    %v1349 = vld [vmem:[#allocation5 + $0x4] sm:$0xf]
    %v1350 = vld [vmem:[#allocation5 + $0x8] sm:$0xf]
    %v1351 = vld [vmem:[#allocation5 + $0xc] sm:$0xf]
    %v1356 = vunpack.c.l.b16 %v1348
    %v1357 = vunpack.c.l.b16 %v1349
    %v1358 = vunpack.c.l.b16 %v1350
    %v1359 = vunpack.c.l.b16 %v1351
    %v1360 = vpack.c.b16 %v1357, %v1356
    %v1361 = vpack.c.b16 %v1359, %v1358
    %v1365 = vsel %vm73, %v1347, 0
    %1367 = vmatprep.subr.bf16.mxu0 0
    %1368 = vmatpush1.bf16.msra.mxu0 %v1360
    %1369 = vmatprep.subr.bf16.mxu0 0
    %1370 = vmatpush1.bf16.msra.mxu0 %v1361
    %1371 = vmatprep.subr.bf16.mxu0 0
    %1372 = vmatpush1.bf16.msra.mxu0 0
    %1373 = vmatprep.subr.bf16.mxu0 0
    %1374 = vmatpush1.bf16.msra.mxu0 0
    %1375 = vmatprep.subr.bf16.mxu0 0
    %1376 = vmatpush1.bf16.msra.mxu0 0
    %1377 = vmatprep.subr.bf16.mxu0 0
    %1378 = vmatpush1.bf16.msra.mxu0 0
    %1379 = vmatprep.subr.bf16.mxu0 0
    %1380 = vmatpush1.bf16.msra.mxu0 0
    %1381 = vmatprep.subr.bf16.mxu0 0
    %1382 = vmatpush1.bf16.msra.mxu0 0
    %1383 = vmatprep.subr.bf16.mxu0 0
    %1384 = vmatpush1.bf16.msra.mxu0 0
    %1385 = vmatprep.subr.bf16.mxu0 0
    %1386 = vmatpush1.bf16.msra.mxu0 0
    %1387 = vmatprep.subr.bf16.mxu0 0
    %1388 = vmatpush1.bf16.msra.mxu0 0
    %1389 = vmatprep.subr.bf16.mxu0 0
    %1390 = vmatpush1.bf16.msra.mxu0 0
    %1391 = vmatprep.subr.bf16.mxu0 0
    %1392 = vmatpush1.bf16.msra.mxu0 0
    %1393 = vmatprep.subr.bf16.mxu0 0
    %1394 = vmatpush1.bf16.msra.mxu0 0
    %1395 = vmatprep.subr.bf16.mxu0 0
    %1396 = vmatpush1.bf16.msra.mxu0 0
    %1397 = vmatprep.subr.bf16.mxu0 0
    %1398 = vmatpush1.bf16.msra.mxu0 0
    %1399 = vmatprep.mubr.bf16.mxu0 0
    %1400 = vmatmul.mubr.bf16.gmra.mrb[0].mxu0 %v1365
    %v1401 = vpop.f32.mrb[0].mxu0
    %v1402 = vadd.f32 0.0, %v1401
    %v1403 = vpop.f32.mrb[0].mxu0
    %v1404 = vpop.f32.mrb[0].mxu0
    %v1405 = vpop.f32.mrb[0].mxu0
    %1406 = vdwg.mxu0
    %v1407 = vxor.u32 %v1402, 2147483648
    %v1408 = vmul.f32 %v1407, 1.442695
    %v1409 = vpow.pop %v1408
    %v1410 = vadd.f32 %v1409, 1.0
    %v1411 = vrcp.pop %v1410
    %v1412 = vmul.f32 1.0, %v1411
    %v1413 = vmul.f32 %v1402, %v1412
    %1415 = vrot.lane.b32.xlu0 %v1402, 64
    %v1416 = vpop.permute.xlu0 %1415
    %v1418 = vmul.f32 %v1413, %v1416
    %v1419 = vpack.c.bf16 %v1418, %v1418
    %v1420 = vld [vmem:[%s6] sm:$0xf]
    %v1421 = vld [vmem:[%s6 + $0x4] sm:$0xf]
    %v1422 = vld [vmem:[%s6 + $0x8] sm:$0xf]
    %v1423 = vld [vmem:[%s6 + $0xc] sm:$0xf]
    %v1424 = vld [vmem:[%s6 + $0x10] sm:$0xf]
    %v1425 = vld [vmem:[%s6 + $0x14] sm:$0xf]
    %v1426 = vld [vmem:[%s6 + $0x18] sm:$0xf]
    %v1427 = vld [vmem:[%s6 + $0x1c] sm:$0xf]
    %v1436 = vunpack.c.l.b16 %v1420
    %v1437 = vunpack.c.l.b16 %v1421
    %v1438 = vunpack.c.l.b16 %v1422
    %v1439 = vunpack.c.l.b16 %v1423
    %v1440 = vunpack.c.l.b16 %v1424
    %v1441 = vunpack.c.l.b16 %v1425
    %v1442 = vunpack.c.l.b16 %v1426
    %v1443 = vunpack.c.l.b16 %v1427
    %v1444 = vpack.c.b16 %v1437, %v1436
    %v1445 = vpack.c.b16 %v1439, %v1438
    %v1446 = vpack.c.b16 %v1441, %v1440
    %v1447 = vpack.c.b16 %v1443, %v1442
    %vm1452 = vcmask 523264
    %v1454 = vsel %vm1452, %v1419, 0
    %1456 = vmatprep.subr.bf16.mxu0 0
    %1457 = vmatpush1.bf16.msra.mxu0 %v1444
    %1458 = vmatprep.subr.bf16.mxu0 0
    %1459 = vmatpush1.bf16.msra.mxu0 %v1445
    %1460 = vmatprep.subr.bf16.mxu0 0
    %1461 = vmatpush1.bf16.msra.mxu0 %v1446
    %1462 = vmatprep.subr.bf16.mxu0 0
    %1463 = vmatpush1.bf16.msra.mxu0 %v1447
    %1464 = vmatprep.subr.bf16.mxu0 0
    %1465 = vmatpush1.bf16.msra.mxu0 0
    %1466 = vmatprep.subr.bf16.mxu0 0
    %1467 = vmatpush1.bf16.msra.mxu0 0
    %1468 = vmatprep.subr.bf16.mxu0 0
    %1469 = vmatpush1.bf16.msra.mxu0 0
    %1470 = vmatprep.subr.bf16.mxu0 0
    %1471 = vmatpush1.bf16.msra.mxu0 0
    %1472 = vmatprep.subr.bf16.mxu0 0
    %1473 = vmatpush1.bf16.msra.mxu0 0
    %1474 = vmatprep.subr.bf16.mxu0 0
    %1475 = vmatpush1.bf16.msra.mxu0 0
    %1476 = vmatprep.subr.bf16.mxu0 0
    %1477 = vmatpush1.bf16.msra.mxu0 0
    %1478 = vmatprep.subr.bf16.mxu0 0
    %1479 = vmatpush1.bf16.msra.mxu0 0
    %1480 = vmatprep.subr.bf16.mxu0 0
    %1481 = vmatpush1.bf16.msra.mxu0 0
    %1482 = vmatprep.subr.bf16.mxu0 0
    %1483 = vmatpush1.bf16.msra.mxu0 0
    %1484 = vmatprep.subr.bf16.mxu0 0
    %1485 = vmatpush1.bf16.msra.mxu0 0
    %1486 = vmatprep.subr.bf16.mxu0 0
    %1487 = vmatpush1.bf16.msra.mxu0 0
    %1488 = vmatprep.mubr.bf16.mxu0 0
    %1489 = vmatmul.mubr.bf16.gmra.mrb[0].mxu0 %v1454
    %v1490 = vpop.f32.mrb[0].mxu0
    %v1491 = vadd.f32 0.0, %v1490
    %v1492 = vpop.f32.mrb[0].mxu0
    %v1493 = vpop.f32.mrb[0].mxu0
    %v1494 = vpop.f32.mrb[0].mxu0
    %1495 = vdwg.mxu0
    %v1496 = vadd.f32 %v1330, %v1491
    %1497 = vst.msk [vmem:[#allocation8] sm:$0xff] %vm73, %v1496
    // Predicated region
    $region50: #{tpu_custom_call.1} parent=1 // pred_check
      _
    $region51: #{tpu_custom_call.1} parent=1 // pred_check_branch
      %1499 = sbr.rel (0) target = $region53
    $region52: #{tpu_custom_call.1} parent=1 // pred_region
      %s1501 = ssub.s32 128, 128
      %1502 = vsyncadd [#allocation4], %s1501
      %s1504 = sshll.u32 [#allocation8], 4
      %s1505 = int_to_ptr.vmem [resolvable:$true] %s1504
      %1507 = dma.vmem_to_hbm [thread:$0]  %s1505, 128, %s9, [#allocation4]
    $region53: #{tpu_custom_call.1} parent=1 // pred_fallthru
      _
    // Predicated region
    $region54: #{tpu_custom_call.1} parent=1 // pred_check
      _
    $region55: #{tpu_custom_call.1} parent=1 // pred_check_branch
      %1509 = sbr.rel (0) target = $region57
    $region56: #{tpu_custom_call.1} parent=1 // pred_region
      %1510 = dma.done [#allocation4], 128
    $region57: #{tpu_custom_call.1} parent=1 // pred_fallthru
      _
    %1511 = vsyncpa [#allocation3], 1
    %1512 = vsyncpa [#allocation6], 1
    %1513 = vsyncpa [#allocation4], 1

</llo_original>
